<compile_context>
chip_gen: v7x
topology: tpu7x:2x2x1
jax: 0.10.0
libtpu: 0.0.40
codegen_flags: <defaults>
</compile_context>

<pallas_src>
import jax
import jax.numpy as jnp
from jax.experimental import pallas as pl
from jax.experimental.pallas import tpu as pltpu

BATCH = 2
LATENT_DIM = 8
LATENT_CHANNEL = 4
SEQ_LENGTH = 16
HIDDEN = 32
KERNEL_SIZE = 3
NUM_CONVS = 6


# ------------------------------ Pallas kernel -------------------------------

def decoder_fused_kernel(z_ref, fc_mix_ref, fc_bias_ref, w_ref, b_ref,
                         out_ref, sp_ref, sn_ref):
    """Fused fc + (ReLU -> ConvTranspose1d(k=3,s=1,p=1)) x 6 + final ReLU.

    z_ref       : (B, D) f32 in SMEM (read as scalars)
    fc_mix_ref  : (B*D, N, H) f32  fc weights pre-permuted to row layout
    fc_bias_ref : (N, H) f32       fc bias in row layout (zero-padded channels)
    w_ref       : (NUM_CONVS, H, 3H) f32   [W_prev | W_mid | W_next] per layer
    b_ref       : (NUM_CONVS, 1, H) f32    conv biases (zero-padded)
    out_ref     : (N, H) f32        column 0 = real output channel
    sp_ref/sn_ref : (N+8, H) f32 scratch used to build row-shifted neighbours
    """
    batch, d_lat = z_ref.shape
    n_rows, hidden = out_ref.shape
    seq_len = n_rows // batch
    num_layers = w_ref.shape[0]

    # Zero the shift scratch once; the rows outside the per-layer store window
    # (row 7 of sp, rows >= N of sn) stay 0 forever and provide the zero
    # padding at the sequence ends.
    sp_ref[...] = jnp.zeros_like(sp_ref)
    sn_ref[...] = jnp.zeros_like(sn_ref)

    # Boundary masks: zero the rows that would otherwise receive a neighbour
    # from the adjacent sequence in the flattened (B*L) row layout.
    rows = jax.lax.broadcasted_iota(jnp.int32, (n_rows, 1), 0)
    not_first = (rows % seq_len != 0).astype(jnp.float32)            # t == 0
    not_last = (rows % seq_len != seq_len - 1).astype(jnp.float32)   # t == L-1

    # ---- fused fc:  x[p, c] = fc_bias[p, c] + sum_{b,d} z[b,d] * fc_mix[b*D+d, p, c]
    x = fc_bias_ref[...]
    for b in range(batch):
        for d in range(d_lat):
            x = x + z_ref[b, d] * fc_mix_ref[b * d_lat + d]

    # ---- ReLU -> ConvTranspose1d(k=3, s=1, p=1), one MXU matmul per layer
    for layer in range(num_layers):
        a = jnp.maximum(x, 0.0)
        # One MXU push: taps stacked along the output lanes -> (N, 3H)
        p = jnp.dot(a, w_ref[layer], preferred_element_type=jnp.float32)
        p_prev = p[:, :hidden]            # W_prev^T a[t]  (will be used at t+1)
        p_mid = p[:, hidden:2 * hidden]   # W_mid^T  a[t]
        p_next = p[:, 2 * hidden:]        # W_next^T a[t]  (will be used at t-1)

        # Row shift by +/- 1 within each sequence: aligned full store, then a
        # load at a sublane offset of +/-1 from the zero-padded scratch.
        sp_ref[pl.ds(8, n_rows), :] = p_prev
        sn_ref[pl.ds(0, n_rows), :] = p_next
        shifted_prev = sp_ref[pl.ds(7, n_rows), :]   # row p -> p_prev[p-1], 0 at p==0
        shifted_next = sn_ref[pl.ds(1, n_rows), :]   # row p -> p_next[p+1], 0 at p==N-1

        x = (shifted_prev * not_first
             + p_mid
             + shifted_next * not_last
             + b_ref[layer])

    out_ref[...] = jnp.maximum(x, 0.0)   # final F.relu


# ------------------------------ wrapper --------------------------------------

def cnn_decoder_forward(z, fc_mix, fc_bias_rows, w_packed, b_packed):
    batch = z.shape[0]
    n_rows = batch * SEQ_LENGTH
    out = pl.pallas_call(
        decoder_fused_kernel,
        out_shape=jax.ShapeDtypeStruct((n_rows, HIDDEN), jnp.float32),
        in_specs=[
            pl.BlockSpec(memory_space=pltpu.MemorySpace.SMEM),   # z (scalars)
            pl.BlockSpec(memory_space=pltpu.MemorySpace.VMEM),   # fc_mix
            pl.BlockSpec(memory_space=pltpu.MemorySpace.VMEM),   # fc_bias_rows
            pl.BlockSpec(memory_space=pltpu.MemorySpace.VMEM),   # w_packed
            pl.BlockSpec(memory_space=pltpu.MemorySpace.VMEM),   # b_packed
        ],
        out_specs=pl.BlockSpec(memory_space=pltpu.MemorySpace.VMEM),
        scratch_shapes=[
            pltpu.VMEM((n_rows + 8, HIDDEN), jnp.float32),
            pltpu.VMEM((n_rows + 8, HIDDEN), jnp.float32),
        ],
        cost_estimate=pl.CostEstimate(
            flops=1_250_000, transcendentals=0, bytes_accessed=160_000),
    )(z, fc_mix, fc_bias_rows, w_packed, b_packed)
    # column 0 is the single real output channel; rows are ordered b*L + t.
    return out[:, 0].reshape(batch, 1, SEQ_LENGTH)


# ----------------------- parameters & one-time packing -----------------------

def init_params(key):
    """Deterministic synthetic parameters in PyTorch layouts."""
    in_ch = [LATENT_CHANNEL] + [HIDDEN] * (NUM_CONVS - 1)
    out_ch = [HIDDEN] * (NUM_CONVS - 1) + [1]
    keys = jax.random.split(key, 2 + 2 * NUM_CONVS)
    fc_w = jax.random.normal(
        keys[0], (LATENT_CHANNEL * SEQ_LENGTH, LATENT_DIM), jnp.float32) * 0.1
    fc_b = jax.random.normal(
        keys[1], (LATENT_CHANNEL * SEQ_LENGTH,), jnp.float32) * 0.05
    convs = []
    for i in range(NUM_CONVS):
        # ConvTranspose1d weight layout: (in_channels, out_channels, kernel)
        wt = jax.random.normal(
            keys[2 + 2 * i], (in_ch[i], out_ch[i], KERNEL_SIZE), jnp.float32) * 0.1
        bt = jax.random.normal(keys[3 + 2 * i], (out_ch[i],), jnp.float32) * 0.05
        convs.append((wt, bt))
    return {"fc_w": fc_w, "fc_b": fc_b, "convs": convs}


def prepare_kernel_inputs(params, batch):
    """Host-side, one-time re-layout of the PyTorch parameters into the packed,
    zero-padded arrays consumed by the fused kernel."""
    C, L, D, H = LATENT_CHANNEL, SEQ_LENGTH, LATENT_DIM, HIDDEN
    n_rows = batch * L
    fc_w, fc_b = params["fc_w"], params["fc_b"]

    # fc_mix[b*D + d, b*L + t, c] = fc_w[c*L + t, d]  (0 off the batch block / c >= C)
    base = fc_w.reshape(C, L, D).transpose(2, 1, 0)           # (D, L, C)
    base = jnp.pad(base, ((0, 0), (0, 0), (0, H - C)))        # (D, L, H)
    fc_mix = jnp.zeros((batch * D, n_rows, H), jnp.float32)
    for b in range(batch):
        fc_mix = fc_mix.at[b * D:(b + 1) * D, b * L:(b + 1) * L, :].set(base)

    # fc_bias_rows[b*L + t, c] = fc_b[c*L + t]
    fb = jnp.pad(fc_b.reshape(C, L).T, ((0, 0), (0, H - C)))  # (L, H)
    fc_bias_rows = jnp.tile(fb, (batch, 1))                   # (N, H)

    # ConvTranspose1d(k=3,s=1,p=1) == regular conv with flipped taps:
    #   y[t] = W_prev^T a[t-1] + W_mid^T a[t] + W_next^T a[t+1] + bias
    # with W_prev = wt[:,:,2], W_mid = wt[:,:,1], W_next = wt[:,:,0].
    # Taps are stacked along the OUTPUT columns -> one (H, 3H) matmul per layer.
    w_blocks, b_blocks = [], []
    for wt, bias in params["convs"]:
        cin, cout, _ = wt.shape
        taps = []
        for j in range(KERNEL_SIZE):                 # j=0 -> prev, 1 -> mid, 2 -> next
            wj = wt[:, :, KERNEL_SIZE - 1 - j]       # (cin, cout)
            wj = jnp.pad(wj, ((0, H - cin), (0, H - cout)))
            taps.append(wj)
        w_blocks.append(jnp.concatenate(taps, axis=1))         # (H, 3H)
        b_blocks.append(jnp.pad(bias, (0, H - cout)).reshape(1, H))
    w_packed = jnp.stack(w_blocks)                             # (NUM_CONVS, H, 3H)
    b_packed = jnp.stack(b_blocks)                             # (NUM_CONVS, 1, H)
    return fc_mix, fc_bias_rows, w_packed, b_packed


# ------------------------------ pure-JAX reference ---------------------------

def torch_reference(z, params):
    """Direct transcription of the PyTorch forward (ConvTranspose1d formula)."""
    C, L = LATENT_CHANNEL, SEQ_LENGTH
    b = z.shape[0]
    x = z @ params["fc_w"].T + params["fc_b"]
    x = x.reshape(b, C, L)
    for wt, bias in params["convs"]:
        x = jnp.maximum(x, 0.0)
        cout = wt.shape[1]
        y = jnp.broadcast_to(bias[None, :, None], (b, cout, L)).astype(jnp.float32)
        contrib = jnp.einsum("bis,iok->boks", x, wt)   # (B, Cout, 3, L)
        y = y.at[:, :, : L - 1].add(contrib[:, :, 0, 1:])    # k=0: input t = s + 1
        y = y + contrib[:, :, 1, :]                          # k=1: input t = s
        y = y.at[:, :, 1:].add(contrib[:, :, 2, : L - 1])    # k=2: input t = s - 1
        x = y
    return jnp.maximum(x, 0.0)


if __name__ == "__main__":
    key = jax.random.PRNGKey(0)
    pkey, zkey = jax.random.split(key)
    params = init_params(pkey)
    z = jax.random.normal(zkey, (BATCH, LATENT_DIM), jnp.float32)

    # One-time, host-side parameter packing (outside the per-call forward).
    fc_mix, fc_bias_rows, w_packed, b_packed = prepare_kernel_inputs(params, BATCH)

    fwd = jax.jit(cnn_decoder_forward)
    out = fwd(z, fc_mix, fc_bias_rows, w_packed, b_packed)
    out = jax.block_until_ready(out)

    ref = torch_reference(z, params)
    assert out.shape == (BATCH, 1, SEQ_LENGTH), out.shape
    if not jnp.allclose(out, ref, rtol=1e-3, atol=1e-3):
        raise AssertionError(
            f"mismatch, max abs err {float(jnp.max(jnp.abs(out - ref)))}")
    print("KERNEL_OK")
</pallas_src>

<mosaic_0001>
module attributes {stable_mosaic.version = 11 : i64} {
  func.func @decoder_fused_kernel(%arg0: memref<2x8xf32, #tpu.memory_space<smem>>, %arg1: memref<16x32x32xf32, #tpu.memory_space<vmem>>, %arg2: memref<32x32xf32, #tpu.memory_space<vmem>>, %arg3: memref<6x32x96xf32, #tpu.memory_space<vmem>>, %arg4: memref<6x1x32xf32, #tpu.memory_space<vmem>>, %arg5: memref<32x32xf32, #tpu.memory_space<vmem>>, %arg6: memref<40x32xf32, #tpu.memory_space<vmem>>, %arg7: memref<40x32xf32, #tpu.memory_space<vmem>>) attributes {dimension_semantics = [], scalar_prefetch = 0 : i64, scratch_operands = 2 : i64, tpu.core_type = #tpu.core_type<tc>} {
    %cst = arith.constant 0.000000e+00 : f32
    %0 = vector.broadcast %cst : f32 to vector<40x32xf32>
    %c0 = arith.constant 0 : index
    %c0_0 = arith.constant 0 : index
    %1 = vector.load %arg6[%c0, %c0_0] : memref<40x32xf32, #tpu.memory_space<vmem>>, vector<40x32xf32>
    tpu.vector_store %arg6[%c0, %c0_0], %0 {strides = array<i32>} : memref<40x32xf32, #tpu.memory_space<vmem>>, vector<40x32xf32>,
    %cst_1 = arith.constant 0.000000e+00 : f32
    %2 = vector.broadcast %cst_1 : f32 to vector<40x32xf32>
    %c0_2 = arith.constant 0 : index
    %c0_3 = arith.constant 0 : index
    %3 = vector.load %arg7[%c0_2, %c0_3] : memref<40x32xf32, #tpu.memory_space<vmem>>, vector<40x32xf32>
    tpu.vector_store %arg7[%c0_2, %c0_3], %2 {strides = array<i32>} : memref<40x32xf32, #tpu.memory_space<vmem>>, vector<40x32xf32>,
    %4 = tpu.iota {dimensions = array<i32: 0>} : vector<32x1xi32>
    %c16_i32 = arith.constant 16 : i32
    %c0_i32 = arith.constant 0 : i32
    %5 = arith.cmpi eq, %c16_i32, %c0_i32 : i32
    %c1_i32 = arith.constant 1 : i32
    %6 = arith.select %5, %c1_i32, %c16_i32 : i32
    %7 = vector.broadcast %6 : i32 to vector<32x1xi32>
    %8 = arith.remsi %4, %7 : vector<32x1xi32>
    %c0_i32_4 = arith.constant 0 : i32
    %9 = vector.broadcast %c0_i32_4 : i32 to vector<32x1xi32>
    %10 = arith.cmpi ne, %8, %9 : vector<32x1xi32>
    %c0_i32_5 = arith.constant 0 : i32
    %11 = vector.broadcast %c0_i32_5 : i32 to vector<32x1xi32>
    %12 = arith.cmpi slt, %8, %11 : vector<32x1xi32>
    %c0_i32_6 = arith.constant 0 : i32
    %13 = arith.cmpi slt, %6, %c0_i32_6 : i32
    %14 = vector.broadcast %13 : i1 to vector<32x1xi1>
    %15 = vector.broadcast %14 : vector<32x1xi1> to vector<32x1xi1>
    %16 = arith.xori %12, %15 : vector<32x1xi1>
    %17 = arith.andi %16, %10 : vector<32x1xi1>
    %18 = vector.broadcast %6 : i32 to vector<32x1xi32>
    %19 = arith.addi %8, %18 : vector<32x1xi32>
    %20 = arith.select %17, %19, %8 : vector<32x1xi1>, vector<32x1xi32>
    %c0_i32_7 = arith.constant 0 : i32
    %21 = vector.broadcast %c0_i32_7 : i32 to vector<32x1xi32>
    %22 = arith.cmpi ne, %20, %21 : vector<32x1xi32>
    %23 = arith.extui %22 : vector<32x1xi1> to vector<32x1xi32>
    %24 = arith.sitofp %23 : vector<32x1xi32> to vector<32x1xf32>
    %c16_i32_8 = arith.constant 16 : i32
    %c0_i32_9 = arith.constant 0 : i32
    %25 = arith.cmpi eq, %c16_i32_8, %c0_i32_9 : i32
    %c1_i32_10 = arith.constant 1 : i32
    %26 = arith.select %25, %c1_i32_10, %c16_i32_8 : i32
    %27 = vector.broadcast %26 : i32 to vector<32x1xi32>
    %28 = arith.remsi %4, %27 : vector<32x1xi32>
    %c0_i32_11 = arith.constant 0 : i32
    %29 = vector.broadcast %c0_i32_11 : i32 to vector<32x1xi32>
    %30 = arith.cmpi ne, %28, %29 : vector<32x1xi32>
    %c0_i32_12 = arith.constant 0 : i32
    %31 = vector.broadcast %c0_i32_12 : i32 to vector<32x1xi32>
    %32 = arith.cmpi slt, %28, %31 : vector<32x1xi32>
    %c0_i32_13 = arith.constant 0 : i32
    %33 = arith.cmpi slt, %26, %c0_i32_13 : i32
    %34 = vector.broadcast %33 : i1 to vector<32x1xi1>
    %35 = vector.broadcast %34 : vector<32x1xi1> to vector<32x1xi1>
    %36 = arith.xori %32, %35 : vector<32x1xi1>
    %37 = arith.andi %36, %30 : vector<32x1xi1>
    %38 = vector.broadcast %26 : i32 to vector<32x1xi32>
    %39 = arith.addi %28, %38 : vector<32x1xi32>
    %40 = arith.select %37, %39, %28 : vector<32x1xi1>, vector<32x1xi32>
    %c15_i32 = arith.constant 15 : i32
    %41 = vector.broadcast %c15_i32 : i32 to vector<32x1xi32>
    %42 = arith.cmpi ne, %40, %41 : vector<32x1xi32>
    %43 = arith.extui %42 : vector<32x1xi1> to vector<32x1xi32>
    %44 = arith.sitofp %43 : vector<32x1xi32> to vector<32x1xf32>
    %c0_14 = arith.constant 0 : index
    %c0_15 = arith.constant 0 : index
    %45 = vector.load %arg2[%c0_14, %c0_15] : memref<32x32xf32, #tpu.memory_space<vmem>>, vector<32x32xf32>
    %c0_16 = arith.constant 0 : index
    %c0_17 = arith.constant 0 : index
    %46 = memref.load %arg0[%c0_16, %c0_17] : memref<2x8xf32, #tpu.memory_space<smem>>
    %c0_18 = arith.constant 0 : index
    %c0_19 = arith.constant 0 : index
    %c0_20 = arith.constant 0 : index
    %47 = vector.load %arg1[%c0_18, %c0_19, %c0_20] : memref<16x32x32xf32, #tpu.memory_space<vmem>>, vector<1x32x32xf32>
    %48 = vector.shape_cast %47 : vector<1x32x32xf32> to vector<32x32xf32>
    %49 = vector.broadcast %46 : f32 to vector<32x32xf32>
    %50 = arith.mulf %49, %48 : vector<32x32xf32>
    %51 = arith.addf %45, %50 : vector<32x32xf32>
    %c0_21 = arith.constant 0 : index
    %c1 = arith.constant 1 : index
    %52 = memref.load %arg0[%c0_21, %c1] : memref<2x8xf32, #tpu.memory_space<smem>>
    %c1_22 = arith.constant 1 : index
    %c0_23 = arith.constant 0 : index
    %c0_24 = arith.constant 0 : index
    %53 = vector.load %arg1[%c1_22, %c0_23, %c0_24] : memref<16x32x32xf32, #tpu.memory_space<vmem>>, vector<1x32x32xf32>
    %54 = vector.shape_cast %53 : vector<1x32x32xf32> to vector<32x32xf32>
    %55 = vector.broadcast %52 : f32 to vector<32x32xf32>
    %56 = arith.mulf %55, %54 : vector<32x32xf32>
    %57 = arith.addf %51, %56 : vector<32x32xf32>
    %c0_25 = arith.constant 0 : index
    %c2 = arith.constant 2 : index
    %58 = memref.load %arg0[%c0_25, %c2] : memref<2x8xf32, #tpu.memory_space<smem>>
    %c2_26 = arith.constant 2 : index
    %c0_27 = arith.constant 0 : index
    %c0_28 = arith.constant 0 : index
    %59 = vector.load %arg1[%c2_26, %c0_27, %c0_28] : memref<16x32x32xf32, #tpu.memory_space<vmem>>, vector<1x32x32xf32>
    %60 = vector.shape_cast %59 : vector<1x32x32xf32> to vector<32x32xf32>
    %61 = vector.broadcast %58 : f32 to vector<32x32xf32>
    %62 = arith.mulf %61, %60 : vector<32x32xf32>
    %63 = arith.addf %57, %62 : vector<32x32xf32>
    %c0_29 = arith.constant 0 : index
    %c3 = arith.constant 3 : index
    %64 = memref.load %arg0[%c0_29, %c3] : memref<2x8xf32, #tpu.memory_space<smem>>
    %c3_30 = arith.constant 3 : index
    %c0_31 = arith.constant 0 : index
    %c0_32 = arith.constant 0 : index
    %65 = vector.load %arg1[%c3_30, %c0_31, %c0_32] : memref<16x32x32xf32, #tpu.memory_space<vmem>>, vector<1x32x32xf32>
    %66 = vector.shape_cast %65 : vector<1x32x32xf32> to vector<32x32xf32>
    %67 = vector.broadcast %64 : f32 to vector<32x32xf32>
    %68 = arith.mulf %67, %66 : vector<32x32xf32>
    %69 = arith.addf %63, %68 : vector<32x32xf32>
    %c0_33 = arith.constant 0 : index
    %c4 = arith.constant 4 : index
    %70 = memref.load %arg0[%c0_33, %c4] : memref<2x8xf32, #tpu.memory_space<smem>>
    %c4_34 = arith.constant 4 : index
    %c0_35 = arith.constant 0 : index
    %c0_36 = arith.constant 0 : index
    %71 = vector.load %arg1[%c4_34, %c0_35, %c0_36] : memref<16x32x32xf32, #tpu.memory_space<vmem>>, vector<1x32x32xf32>
    %72 = vector.shape_cast %71 : vector<1x32x32xf32> to vector<32x32xf32>
    %73 = vector.broadcast %70 : f32 to vector<32x32xf32>
    %74 = arith.mulf %73, %72 : vector<32x32xf32>
    %75 = arith.addf %69, %74 : vector<32x32xf32>
    %c0_37 = arith.constant 0 : index
    %c5 = arith.constant 5 : index
    %76 = memref.load %arg0[%c0_37, %c5] : memref<2x8xf32, #tpu.memory_space<smem>>
    %c5_38 = arith.constant 5 : index
    %c0_39 = arith.constant 0 : index
    %c0_40 = arith.constant 0 : index
    %77 = vector.load %arg1[%c5_38, %c0_39, %c0_40] : memref<16x32x32xf32, #tpu.memory_space<vmem>>, vector<1x32x32xf32>
    %78 = vector.shape_cast %77 : vector<1x32x32xf32> to vector<32x32xf32>
    %79 = vector.broadcast %76 : f32 to vector<32x32xf32>
    %80 = arith.mulf %79, %78 : vector<32x32xf32>
    %81 = arith.addf %75, %80 : vector<32x32xf32>
    %c0_41 = arith.constant 0 : index
    %c6 = arith.constant 6 : index
    %82 = memref.load %arg0[%c0_41, %c6] : memref<2x8xf32, #tpu.memory_space<smem>>
    %c6_42 = arith.constant 6 : index
    %c0_43 = arith.constant 0 : index
    %c0_44 = arith.constant 0 : index
    %83 = vector.load %arg1[%c6_42, %c0_43, %c0_44] : memref<16x32x32xf32, #tpu.memory_space<vmem>>, vector<1x32x32xf32>
    %84 = vector.shape_cast %83 : vector<1x32x32xf32> to vector<32x32xf32>
    %85 = vector.broadcast %82 : f32 to vector<32x32xf32>
    %86 = arith.mulf %85, %84 : vector<32x32xf32>
    %87 = arith.addf %81, %86 : vector<32x32xf32>
    %c0_45 = arith.constant 0 : index
    %c7 = arith.constant 7 : index
    %88 = memref.load %arg0[%c0_45, %c7] : memref<2x8xf32, #tpu.memory_space<smem>>
    %c7_46 = arith.constant 7 : index
    %c0_47 = arith.constant 0 : index
    %c0_48 = arith.constant 0 : index
    %89 = vector.load %arg1[%c7_46, %c0_47, %c0_48] : memref<16x32x32xf32, #tpu.memory_space<vmem>>, vector<1x32x32xf32>
    %90 = vector.shape_cast %89 : vector<1x32x32xf32> to vector<32x32xf32>
    %91 = vector.broadcast %88 : f32 to vector<32x32xf32>
    %92 = arith.mulf %91, %90 : vector<32x32xf32>
    %93 = arith.addf %87, %92 : vector<32x32xf32>
    %c1_49 = arith.constant 1 : index
    %c0_50 = arith.constant 0 : index
    %94 = memref.load %arg0[%c1_49, %c0_50] : memref<2x8xf32, #tpu.memory_space<smem>>
    %c8 = arith.constant 8 : index
    %c0_51 = arith.constant 0 : index
    %c0_52 = arith.constant 0 : index
    %95 = vector.load %arg1[%c8, %c0_51, %c0_52] : memref<16x32x32xf32, #tpu.memory_space<vmem>>, vector<1x32x32xf32>
    %96 = vector.shape_cast %95 : vector<1x32x32xf32> to vector<32x32xf32>
    %97 = vector.broadcast %94 : f32 to vector<32x32xf32>
    %98 = arith.mulf %97, %96 : vector<32x32xf32>
    %99 = arith.addf %93, %98 : vector<32x32xf32>
    %c1_53 = arith.constant 1 : index
    %c1_54 = arith.constant 1 : index
    %100 = memref.load %arg0[%c1_53, %c1_54] : memref<2x8xf32, #tpu.memory_space<smem>>
    %c9 = arith.constant 9 : index
    %c0_55 = arith.constant 0 : index
    %c0_56 = arith.constant 0 : index
    %101 = vector.load %arg1[%c9, %c0_55, %c0_56] : memref<16x32x32xf32, #tpu.memory_space<vmem>>, vector<1x32x32xf32>
    %102 = vector.shape_cast %101 : vector<1x32x32xf32> to vector<32x32xf32>
    %103 = vector.broadcast %100 : f32 to vector<32x32xf32>
    %104 = arith.mulf %103, %102 : vector<32x32xf32>
    %105 = arith.addf %99, %104 : vector<32x32xf32>
    %c1_57 = arith.constant 1 : index
    %c2_58 = arith.constant 2 : index
    %106 = memref.load %arg0[%c1_57, %c2_58] : memref<2x8xf32, #tpu.memory_space<smem>>
    %c10 = arith.constant 10 : index
    %c0_59 = arith.constant 0 : index
    %c0_60 = arith.constant 0 : index
    %107 = vector.load %arg1[%c10, %c0_59, %c0_60] : memref<16x32x32xf32, #tpu.memory_space<vmem>>, vector<1x32x32xf32>
    %108 = vector.shape_cast %107 : vector<1x32x32xf32> to vector<32x32xf32>
    %109 = vector.broadcast %106 : f32 to vector<32x32xf32>
    %110 = arith.mulf %109, %108 : vector<32x32xf32>
    %111 = arith.addf %105, %110 : vector<32x32xf32>
    %c1_61 = arith.constant 1 : index
    %c3_62 = arith.constant 3 : index
    %112 = memref.load %arg0[%c1_61, %c3_62] : memref<2x8xf32, #tpu.memory_space<smem>>
    %c11 = arith.constant 11 : index
    %c0_63 = arith.constant 0 : index
    %c0_64 = arith.constant 0 : index
    %113 = vector.load %arg1[%c11, %c0_63, %c0_64] : memref<16x32x32xf32, #tpu.memory_space<vmem>>, vector<1x32x32xf32>
    %114 = vector.shape_cast %113 : vector<1x32x32xf32> to vector<32x32xf32>
    %115 = vector.broadcast %112 : f32 to vector<32x32xf32>
    %116 = arith.mulf %115, %114 : vector<32x32xf32>
    %117 = arith.addf %111, %116 : vector<32x32xf32>
    %c1_65 = arith.constant 1 : index
    %c4_66 = arith.constant 4 : index
    %118 = memref.load %arg0[%c1_65, %c4_66] : memref<2x8xf32, #tpu.memory_space<smem>>
    %c12 = arith.constant 12 : index
    %c0_67 = arith.constant 0 : index
    %c0_68 = arith.constant 0 : index
    %119 = vector.load %arg1[%c12, %c0_67, %c0_68] : memref<16x32x32xf32, #tpu.memory_space<vmem>>, vector<1x32x32xf32>
    %120 = vector.shape_cast %119 : vector<1x32x32xf32> to vector<32x32xf32>
    %121 = vector.broadcast %118 : f32 to vector<32x32xf32>
    %122 = arith.mulf %121, %120 : vector<32x32xf32>
    %123 = arith.addf %117, %122 : vector<32x32xf32>
    %c1_69 = arith.constant 1 : index
    %c5_70 = arith.constant 5 : index
    %124 = memref.load %arg0[%c1_69, %c5_70] : memref<2x8xf32, #tpu.memory_space<smem>>
    %c13 = arith.constant 13 : index
    %c0_71 = arith.constant 0 : index
    %c0_72 = arith.constant 0 : index
    %125 = vector.load %arg1[%c13, %c0_71, %c0_72] : memref<16x32x32xf32, #tpu.memory_space<vmem>>, vector<1x32x32xf32>
    %126 = vector.shape_cast %125 : vector<1x32x32xf32> to vector<32x32xf32>
    %127 = vector.broadcast %124 : f32 to vector<32x32xf32>
    %128 = arith.mulf %127, %126 : vector<32x32xf32>
    %129 = arith.addf %123, %128 : vector<32x32xf32>
    %c1_73 = arith.constant 1 : index
    %c6_74 = arith.constant 6 : index
    %130 = memref.load %arg0[%c1_73, %c6_74] : memref<2x8xf32, #tpu.memory_space<smem>>
    %c14 = arith.constant 14 : index
    %c0_75 = arith.constant 0 : index
    %c0_76 = arith.constant 0 : index
    %131 = vector.load %arg1[%c14, %c0_75, %c0_76] : memref<16x32x32xf32, #tpu.memory_space<vmem>>, vector<1x32x32xf32>
    %132 = vector.shape_cast %131 : vector<1x32x32xf32> to vector<32x32xf32>
    %133 = vector.broadcast %130 : f32 to vector<32x32xf32>
    %134 = arith.mulf %133, %132 : vector<32x32xf32>
    %135 = arith.addf %129, %134 : vector<32x32xf32>
    %c1_77 = arith.constant 1 : index
    %c7_78 = arith.constant 7 : index
    %136 = memref.load %arg0[%c1_77, %c7_78] : memref<2x8xf32, #tpu.memory_space<smem>>
    %c15 = arith.constant 15 : index
    %c0_79 = arith.constant 0 : index
    %c0_80 = arith.constant 0 : index
    %137 = vector.load %arg1[%c15, %c0_79, %c0_80] : memref<16x32x32xf32, #tpu.memory_space<vmem>>, vector<1x32x32xf32>
    %138 = vector.shape_cast %137 : vector<1x32x32xf32> to vector<32x32xf32>
    %139 = vector.broadcast %136 : f32 to vector<32x32xf32>
    %140 = arith.mulf %139, %138 : vector<32x32xf32>
    %141 = arith.addf %135, %140 : vector<32x32xf32>
    %cst_81 = arith.constant 0.000000e+00 : f32
    %142 = vector.broadcast %cst_81 : f32 to vector<32x32xf32>
    %143 = arith.maximumf %141, %142 : vector<32x32xf32>
    %c0_82 = arith.constant 0 : index
    %c0_83 = arith.constant 0 : index
    %c0_84 = arith.constant 0 : index
    %144 = vector.load %arg3[%c0_82, %c0_83, %c0_84] : memref<6x32x96xf32, #tpu.memory_space<vmem>>, vector<1x32x96xf32>
    %145 = vector.shape_cast %144 : vector<1x32x96xf32> to vector<32x96xf32>
    %cst_85 = arith.constant dense<0.000000e+00> : vector<32x96xf32>
    %146 = tpu.matmul %143, %145, %cst_85 {dimension_numbers = #tpu.dot_dimension_numbers<[1], [0], [0], [1], [0, 0, 1, 1], [], []>} : vector<32x32xf32>, vector<32x96xf32>, vector<32x96xf32> -> vector<32x96xf32>
    %147 = vector.extract_strided_slice %146 {offsets = [0, 0], sizes = [32, 32], strides = [1, 1]} : vector<32x96xf32> to vector<32x32xf32>
    %148 = vector.extract_strided_slice %146 {offsets = [0, 32], sizes = [32, 32], strides = [1, 1]} : vector<32x96xf32> to vector<32x32xf32>
    %149 = vector.extract_strided_slice %146 {offsets = [0, 64], sizes = [32, 32], strides = [1, 1]} : vector<32x96xf32> to vector<32x32xf32>
    %c8_86 = arith.constant 8 : index
    %c0_87 = arith.constant 0 : index
    %150 = vector.load %arg6[%c8_86, %c0_87] : memref<40x32xf32, #tpu.memory_space<vmem>>, vector<32x32xf32>
    tpu.vector_store %arg6[%c8_86, %c0_87], %147 {strides = array<i32>} : memref<40x32xf32, #tpu.memory_space<vmem>>, vector<32x32xf32>,
    %c0_88 = arith.constant 0 : index
    %c0_89 = arith.constant 0 : index
    %151 = vector.load %arg7[%c0_88, %c0_89] : memref<40x32xf32, #tpu.memory_space<vmem>>, vector<32x32xf32>
    tpu.vector_store %arg7[%c0_88, %c0_89], %149 {strides = array<i32>} : memref<40x32xf32, #tpu.memory_space<vmem>>, vector<32x32xf32>,
    %c7_90 = arith.constant 7 : index
    %c0_91 = arith.constant 0 : index
    %152 = vector.load %arg6[%c7_90, %c0_91] : memref<40x32xf32, #tpu.memory_space<vmem>>, vector<32x32xf32>
    %c1_92 = arith.constant 1 : index
    %c0_93 = arith.constant 0 : index
    %153 = vector.load %arg7[%c1_92, %c0_93] : memref<40x32xf32, #tpu.memory_space<vmem>>, vector<32x32xf32>
    %154 = vector.broadcast %24 : vector<32x1xf32> to vector<32x32xf32>
    %155 = arith.mulf %152, %154 : vector<32x32xf32>
    %156 = arith.addf %155, %148 : vector<32x32xf32>
    %157 = vector.broadcast %44 : vector<32x1xf32> to vector<32x32xf32>
    %158 = arith.mulf %153, %157 : vector<32x32xf32>
    %159 = arith.addf %156, %158 : vector<32x32xf32>
    %c0_94 = arith.constant 0 : index
    %c0_95 = arith.constant 0 : index
    %c0_96 = arith.constant 0 : index
    %160 = vector.load %arg4[%c0_94, %c0_95, %c0_96] : memref<6x1x32xf32, #tpu.memory_space<vmem>>, vector<1x1x32xf32>
    %161 = vector.shape_cast %160 : vector<1x1x32xf32> to vector<1x32xf32>
    %162 = vector.broadcast %161 : vector<1x32xf32> to vector<32x32xf32>
    %163 = arith.addf %159, %162 : vector<32x32xf32>
    %cst_97 = arith.constant 0.000000e+00 : f32
    %164 = vector.broadcast %cst_97 : f32 to vector<32x32xf32>
    %165 = arith.maximumf %163, %164 : vector<32x32xf32>
    %c1_98 = arith.constant 1 : index
    %c0_99 = arith.constant 0 : index
    %c0_100 = arith.constant 0 : index
    %166 = vector.load %arg3[%c1_98, %c0_99, %c0_100] : memref<6x32x96xf32, #tpu.memory_space<vmem>>, vector<1x32x96xf32>
    %167 = vector.shape_cast %166 : vector<1x32x96xf32> to vector<32x96xf32>
    %cst_101 = arith.constant dense<0.000000e+00> : vector<32x96xf32>
    %168 = tpu.matmul %165, %167, %cst_101 {dimension_numbers = #tpu.dot_dimension_numbers<[1], [0], [0], [1], [0, 0, 1, 1], [], []>} : vector<32x32xf32>, vector<32x96xf32>, vector<32x96xf32> -> vector<32x96xf32>
    %169 = vector.extract_strided_slice %168 {offsets = [0, 0], sizes = [32, 32], strides = [1, 1]} : vector<32x96xf32> to vector<32x32xf32>
    %170 = vector.extract_strided_slice %168 {offsets = [0, 32], sizes = [32, 32], strides = [1, 1]} : vector<32x96xf32> to vector<32x32xf32>
    %171 = vector.extract_strided_slice %168 {offsets = [0, 64], sizes = [32, 32], strides = [1, 1]} : vector<32x96xf32> to vector<32x32xf32>
    %c8_102 = arith.constant 8 : index
    %c0_103 = arith.constant 0 : index
    %172 = vector.load %arg6[%c8_102, %c0_103] : memref<40x32xf32, #tpu.memory_space<vmem>>, vector<32x32xf32>
    tpu.vector_store %arg6[%c8_102, %c0_103], %169 {strides = array<i32>} : memref<40x32xf32, #tpu.memory_space<vmem>>, vector<32x32xf32>,
    %c0_104 = arith.constant 0 : index
    %c0_105 = arith.constant 0 : index
    %173 = vector.load %arg7[%c0_104, %c0_105] : memref<40x32xf32, #tpu.memory_space<vmem>>, vector<32x32xf32>
    tpu.vector_store %arg7[%c0_104, %c0_105], %171 {strides = array<i32>} : memref<40x32xf32, #tpu.memory_space<vmem>>, vector<32x32xf32>,
    %c7_106 = arith.constant 7 : index
    %c0_107 = arith.constant 0 : index
    %174 = vector.load %arg6[%c7_106, %c0_107] : memref<40x32xf32, #tpu.memory_space<vmem>>, vector<32x32xf32>
    %c1_108 = arith.constant 1 : index
    %c0_109 = arith.constant 0 : index
    %175 = vector.load %arg7[%c1_108, %c0_109] : memref<40x32xf32, #tpu.memory_space<vmem>>, vector<32x32xf32>
    %176 = vector.broadcast %24 : vector<32x1xf32> to vector<32x32xf32>
    %177 = arith.mulf %174, %176 : vector<32x32xf32>
    %178 = arith.addf %177, %170 : vector<32x32xf32>
    %179 = vector.broadcast %44 : vector<32x1xf32> to vector<32x32xf32>
    %180 = arith.mulf %175, %179 : vector<32x32xf32>
    %181 = arith.addf %178, %180 : vector<32x32xf32>
    %c1_110 = arith.constant 1 : index
    %c0_111 = arith.constant 0 : index
    %c0_112 = arith.constant 0 : index
    %182 = vector.load %arg4[%c1_110, %c0_111, %c0_112] : memref<6x1x32xf32, #tpu.memory_space<vmem>>, vector<1x1x32xf32>
    %183 = vector.shape_cast %182 : vector<1x1x32xf32> to vector<1x32xf32>
    %184 = vector.broadcast %183 : vector<1x32xf32> to vector<32x32xf32>
    %185 = arith.addf %181, %184 : vector<32x32xf32>
    %cst_113 = arith.constant 0.000000e+00 : f32
    %186 = vector.broadcast %cst_113 : f32 to vector<32x32xf32>
    %187 = arith.maximumf %185, %186 : vector<32x32xf32>
    %c2_114 = arith.constant 2 : index
    %c0_115 = arith.constant 0 : index
    %c0_116 = arith.constant 0 : index
    %188 = vector.load %arg3[%c2_114, %c0_115, %c0_116] : memref<6x32x96xf32, #tpu.memory_space<vmem>>, vector<1x32x96xf32>
    %189 = vector.shape_cast %188 : vector<1x32x96xf32> to vector<32x96xf32>
    %cst_117 = arith.constant dense<0.000000e+00> : vector<32x96xf32>
    %190 = tpu.matmul %187, %189, %cst_117 {dimension_numbers = #tpu.dot_dimension_numbers<[1], [0], [0], [1], [0, 0, 1, 1], [], []>} : vector<32x32xf32>, vector<32x96xf32>, vector<32x96xf32> -> vector<32x96xf32>
    %191 = vector.extract_strided_slice %190 {offsets = [0, 0], sizes = [32, 32], strides = [1, 1]} : vector<32x96xf32> to vector<32x32xf32>
    %192 = vector.extract_strided_slice %190 {offsets = [0, 32], sizes = [32, 32], strides = [1, 1]} : vector<32x96xf32> to vector<32x32xf32>
    %193 = vector.extract_strided_slice %190 {offsets = [0, 64], sizes = [32, 32], strides = [1, 1]} : vector<32x96xf32> to vector<32x32xf32>
    %c8_118 = arith.constant 8 : index
    %c0_119 = arith.constant 0 : index
    %194 = vector.load %arg6[%c8_118, %c0_119] : memref<40x32xf32, #tpu.memory_space<vmem>>, vector<32x32xf32>
    tpu.vector_store %arg6[%c8_118, %c0_119], %191 {strides = array<i32>} : memref<40x32xf32, #tpu.memory_space<vmem>>, vector<32x32xf32>,
    %c0_120 = arith.constant 0 : index
    %c0_121 = arith.constant 0 : index
    %195 = vector.load %arg7[%c0_120, %c0_121] : memref<40x32xf32, #tpu.memory_space<vmem>>, vector<32x32xf32>
    tpu.vector_store %arg7[%c0_120, %c0_121], %193 {strides = array<i32>} : memref<40x32xf32, #tpu.memory_space<vmem>>, vector<32x32xf32>,
    %c7_122 = arith.constant 7 : index
    %c0_123 = arith.constant 0 : index
    %196 = vector.load %arg6[%c7_122, %c0_123] : memref<40x32xf32, #tpu.memory_space<vmem>>, vector<32x32xf32>
    %c1_124 = arith.constant 1 : index
    %c0_125 = arith.constant 0 : index
    %197 = vector.load %arg7[%c1_124, %c0_125] : memref<40x32xf32, #tpu.memory_space<vmem>>, vector<32x32xf32>
    %198 = vector.broadcast %24 : vector<32x1xf32> to vector<32x32xf32>
    %199 = arith.mulf %196, %198 : vector<32x32xf32>
    %200 = arith.addf %199, %192 : vector<32x32xf32>
    %201 = vector.broadcast %44 : vector<32x1xf32> to vector<32x32xf32>
    %202 = arith.mulf %197, %201 : vector<32x32xf32>
    %203 = arith.addf %200, %202 : vector<32x32xf32>
    %c2_126 = arith.constant 2 : index
    %c0_127 = arith.constant 0 : index
    %c0_128 = arith.constant 0 : index
    %204 = vector.load %arg4[%c2_126, %c0_127, %c0_128] : memref<6x1x32xf32, #tpu.memory_space<vmem>>, vector<1x1x32xf32>
    %205 = vector.shape_cast %204 : vector<1x1x32xf32> to vector<1x32xf32>
    %206 = vector.broadcast %205 : vector<1x32xf32> to vector<32x32xf32>
    %207 = arith.addf %203, %206 : vector<32x32xf32>
    %cst_129 = arith.constant 0.000000e+00 : f32
    %208 = vector.broadcast %cst_129 : f32 to vector<32x32xf32>
    %209 = arith.maximumf %207, %208 : vector<32x32xf32>
    %c3_130 = arith.constant 3 : index
    %c0_131 = arith.constant 0 : index
    %c0_132 = arith.constant 0 : index
    %210 = vector.load %arg3[%c3_130, %c0_131, %c0_132] : memref<6x32x96xf32, #tpu.memory_space<vmem>>, vector<1x32x96xf32>
    %211 = vector.shape_cast %210 : vector<1x32x96xf32> to vector<32x96xf32>
    %cst_133 = arith.constant dense<0.000000e+00> : vector<32x96xf32>
    %212 = tpu.matmul %209, %211, %cst_133 {dimension_numbers = #tpu.dot_dimension_numbers<[1], [0], [0], [1], [0, 0, 1, 1], [], []>} : vector<32x32xf32>, vector<32x96xf32>, vector<32x96xf32> -> vector<32x96xf32>
    %213 = vector.extract_strided_slice %212 {offsets = [0, 0], sizes = [32, 32], strides = [1, 1]} : vector<32x96xf32> to vector<32x32xf32>
    %214 = vector.extract_strided_slice %212 {offsets = [0, 32], sizes = [32, 32], strides = [1, 1]} : vector<32x96xf32> to vector<32x32xf32>
    %215 = vector.extract_strided_slice %212 {offsets = [0, 64], sizes = [32, 32], strides = [1, 1]} : vector<32x96xf32> to vector<32x32xf32>
    %c8_134 = arith.constant 8 : index
    %c0_135 = arith.constant 0 : index
    %216 = vector.load %arg6[%c8_134, %c0_135] : memref<40x32xf32, #tpu.memory_space<vmem>>, vector<32x32xf32>
    tpu.vector_store %arg6[%c8_134, %c0_135], %213 {strides = array<i32>} : memref<40x32xf32, #tpu.memory_space<vmem>>, vector<32x32xf32>,
    %c0_136 = arith.constant 0 : index
    %c0_137 = arith.constant 0 : index
    %217 = vector.load %arg7[%c0_136, %c0_137] : memref<40x32xf32, #tpu.memory_space<vmem>>, vector<32x32xf32>
    tpu.vector_store %arg7[%c0_136, %c0_137], %215 {strides = array<i32>} : memref<40x32xf32, #tpu.memory_space<vmem>>, vector<32x32xf32>,
    %c7_138 = arith.constant 7 : index
    %c0_139 = arith.constant 0 : index
    %218 = vector.load %arg6[%c7_138, %c0_139] : memref<40x32xf32, #tpu.memory_space<vmem>>, vector<32x32xf32>
    %c1_140 = arith.constant 1 : index
    %c0_141 = arith.constant 0 : index
    %219 = vector.load %arg7[%c1_140, %c0_141] : memref<40x32xf32, #tpu.memory_space<vmem>>, vector<32x32xf32>
    %220 = vector.broadcast %24 : vector<32x1xf32> to vector<32x32xf32>
    %221 = arith.mulf %218, %220 : vector<32x32xf32>
    %222 = arith.addf %221, %214 : vector<32x32xf32>
    %223 = vector.broadcast %44 : vector<32x1xf32> to vector<32x32xf32>
    %224 = arith.mulf %219, %223 : vector<32x32xf32>
    %225 = arith.addf %222, %224 : vector<32x32xf32>
    %c3_142 = arith.constant 3 : index
    %c0_143 = arith.constant 0 : index
    %c0_144 = arith.constant 0 : index
    %226 = vector.load %arg4[%c3_142, %c0_143, %c0_144] : memref<6x1x32xf32, #tpu.memory_space<vmem>>, vector<1x1x32xf32>
    %227 = vector.shape_cast %226 : vector<1x1x32xf32> to vector<1x32xf32>
    %228 = vector.broadcast %227 : vector<1x32xf32> to vector<32x32xf32>
    %229 = arith.addf %225, %228 : vector<32x32xf32>
    %cst_145 = arith.constant 0.000000e+00 : f32
    %230 = vector.broadcast %cst_145 : f32 to vector<32x32xf32>
    %231 = arith.maximumf %229, %230 : vector<32x32xf32>
    %c4_146 = arith.constant 4 : index
    %c0_147 = arith.constant 0 : index
    %c0_148 = arith.constant 0 : index
    %232 = vector.load %arg3[%c4_146, %c0_147, %c0_148] : memref<6x32x96xf32, #tpu.memory_space<vmem>>, vector<1x32x96xf32>
    %233 = vector.shape_cast %232 : vector<1x32x96xf32> to vector<32x96xf32>
    %cst_149 = arith.constant dense<0.000000e+00> : vector<32x96xf32>
    %234 = tpu.matmul %231, %233, %cst_149 {dimension_numbers = #tpu.dot_dimension_numbers<[1], [0], [0], [1], [0, 0, 1, 1], [], []>} : vector<32x32xf32>, vector<32x96xf32>, vector<32x96xf32> -> vector<32x96xf32>
    %235 = vector.extract_strided_slice %234 {offsets = [0, 0], sizes = [32, 32], strides = [1, 1]} : vector<32x96xf32> to vector<32x32xf32>
    %236 = vector.extract_strided_slice %234 {offsets = [0, 32], sizes = [32, 32], strides = [1, 1]} : vector<32x96xf32> to vector<32x32xf32>
    %237 = vector.extract_strided_slice %234 {offsets = [0, 64], sizes = [32, 32], strides = [1, 1]} : vector<32x96xf32> to vector<32x32xf32>
    %c8_150 = arith.constant 8 : index
    %c0_151 = arith.constant 0 : index
    %238 = vector.load %arg6[%c8_150, %c0_151] : memref<40x32xf32, #tpu.memory_space<vmem>>, vector<32x32xf32>
    tpu.vector_store %arg6[%c8_150, %c0_151], %235 {strides = array<i32>} : memref<40x32xf32, #tpu.memory_space<vmem>>, vector<32x32xf32>,
    %c0_152 = arith.constant 0 : index
    %c0_153 = arith.constant 0 : index
    %239 = vector.load %arg7[%c0_152, %c0_153] : memref<40x32xf32, #tpu.memory_space<vmem>>, vector<32x32xf32>
    tpu.vector_store %arg7[%c0_152, %c0_153], %237 {strides = array<i32>} : memref<40x32xf32, #tpu.memory_space<vmem>>, vector<32x32xf32>,
    %c7_154 = arith.constant 7 : index
    %c0_155 = arith.constant 0 : index
    %240 = vector.load %arg6[%c7_154, %c0_155] : memref<40x32xf32, #tpu.memory_space<vmem>>, vector<32x32xf32>
    %c1_156 = arith.constant 1 : index
    %c0_157 = arith.constant 0 : index
    %241 = vector.load %arg7[%c1_156, %c0_157] : memref<40x32xf32, #tpu.memory_space<vmem>>, vector<32x32xf32>
    %242 = vector.broadcast %24 : vector<32x1xf32> to vector<32x32xf32>
    %243 = arith.mulf %240, %242 : vector<32x32xf32>
    %244 = arith.addf %243, %236 : vector<32x32xf32>
    %245 = vector.broadcast %44 : vector<32x1xf32> to vector<32x32xf32>
    %246 = arith.mulf %241, %245 : vector<32x32xf32>
    %247 = arith.addf %244, %246 : vector<32x32xf32>
    %c4_158 = arith.constant 4 : index
    %c0_159 = arith.constant 0 : index
    %c0_160 = arith.constant 0 : index
    %248 = vector.load %arg4[%c4_158, %c0_159, %c0_160] : memref<6x1x32xf32, #tpu.memory_space<vmem>>, vector<1x1x32xf32>
    %249 = vector.shape_cast %248 : vector<1x1x32xf32> to vector<1x32xf32>
    %250 = vector.broadcast %249 : vector<1x32xf32> to vector<32x32xf32>
    %251 = arith.addf %247, %250 : vector<32x32xf32>
    %cst_161 = arith.constant 0.000000e+00 : f32
    %252 = vector.broadcast %cst_161 : f32 to vector<32x32xf32>
    %253 = arith.maximumf %251, %252 : vector<32x32xf32>
    %c5_162 = arith.constant 5 : index
    %c0_163 = arith.constant 0 : index
    %c0_164 = arith.constant 0 : index
    %254 = vector.load %arg3[%c5_162, %c0_163, %c0_164] : memref<6x32x96xf32, #tpu.memory_space<vmem>>, vector<1x32x96xf32>
    %255 = vector.shape_cast %254 : vector<1x32x96xf32> to vector<32x96xf32>
    %cst_165 = arith.constant dense<0.000000e+00> : vector<32x96xf32>
    %256 = tpu.matmul %253, %255, %cst_165 {dimension_numbers = #tpu.dot_dimension_numbers<[1], [0], [0], [1], [0, 0, 1, 1], [], []>} : vector<32x32xf32>, vector<32x96xf32>, vector<32x96xf32> -> vector<32x96xf32>
    %257 = vector.extract_strided_slice %256 {offsets = [0, 0], sizes = [32, 32], strides = [1, 1]} : vector<32x96xf32> to vector<32x32xf32>
    %258 = vector.extract_strided_slice %256 {offsets = [0, 32], sizes = [32, 32], strides = [1, 1]} : vector<32x96xf32> to vector<32x32xf32>
    %259 = vector.extract_strided_slice %256 {offsets = [0, 64], sizes = [32, 32], strides = [1, 1]} : vector<32x96xf32> to vector<32x32xf32>
    %c8_166 = arith.constant 8 : index
    %c0_167 = arith.constant 0 : index
    %260 = vector.load %arg6[%c8_166, %c0_167] : memref<40x32xf32, #tpu.memory_space<vmem>>, vector<32x32xf32>
    tpu.vector_store %arg6[%c8_166, %c0_167], %257 {strides = array<i32>} : memref<40x32xf32, #tpu.memory_space<vmem>>, vector<32x32xf32>,
    %c0_168 = arith.constant 0 : index
    %c0_169 = arith.constant 0 : index
    %261 = vector.load %arg7[%c0_168, %c0_169] : memref<40x32xf32, #tpu.memory_space<vmem>>, vector<32x32xf32>
    tpu.vector_store %arg7[%c0_168, %c0_169], %259 {strides = array<i32>} : memref<40x32xf32, #tpu.memory_space<vmem>>, vector<32x32xf32>,
    %c7_170 = arith.constant 7 : index
    %c0_171 = arith.constant 0 : index
    %262 = vector.load %arg6[%c7_170, %c0_171] : memref<40x32xf32, #tpu.memory_space<vmem>>, vector<32x32xf32>
    %c1_172 = arith.constant 1 : index
    %c0_173 = arith.constant 0 : index
    %263 = vector.load %arg7[%c1_172, %c0_173] : memref<40x32xf32, #tpu.memory_space<vmem>>, vector<32x32xf32>
    %264 = vector.broadcast %24 : vector<32x1xf32> to vector<32x32xf32>
    %265 = arith.mulf %262, %264 : vector<32x32xf32>
    %266 = arith.addf %265, %258 : vector<32x32xf32>
    %267 = vector.broadcast %44 : vector<32x1xf32> to vector<32x32xf32>
    %268 = arith.mulf %263, %267 : vector<32x32xf32>
    %269 = arith.addf %266, %268 : vector<32x32xf32>
    %c5_174 = arith.constant 5 : index
    %c0_175 = arith.constant 0 : index
    %c0_176 = arith.constant 0 : index
    %270 = vector.load %arg4[%c5_174, %c0_175, %c0_176] : memref<6x1x32xf32, #tpu.memory_space<vmem>>, vector<1x1x32xf32>
    %271 = vector.shape_cast %270 : vector<1x1x32xf32> to vector<1x32xf32>
    %272 = vector.broadcast %271 : vector<1x32xf32> to vector<32x32xf32>
    %273 = arith.addf %269, %272 : vector<32x32xf32>
    %cst_177 = arith.constant 0.000000e+00 : f32
    %274 = vector.broadcast %cst_177 : f32 to vector<32x32xf32>
    %275 = arith.maximumf %273, %274 : vector<32x32xf32>
    %c0_178 = arith.constant 0 : index
    %c0_179 = arith.constant 0 : index
    %276 = vector.load %arg5[%c0_178, %c0_179] : memref<32x32xf32, #tpu.memory_space<vmem>>, vector<32x32xf32>
    tpu.vector_store %arg5[%c0_178, %c0_179], %275 {strides = array<i32>} : memref<32x32xf32, #tpu.memory_space<vmem>>, vector<32x32xf32>,
    return
  }
}

</mosaic_0001>

<llo_original>
// kernel: squeeze.1
$region0: #{squeeze.1}
  %s0 = inlined_call_operand.vmem [shape: f32[32], index: 0, kind: input, shape index: {}]
  %s1 = inlined_call_operand.hbm [shape: f32[2,1,16], index: 1, kind: output, shape index: {}]
  $region1: #{squeeze.1} parent=0
    #allocation0 [shape = 'u8[1024]{0}', space=vmem, size = 0x400, scoped, tag = 'operand span for operand 1']
    #allocation1 [shape = 's32[1]{0}', space=sflag, size = 0x4, scoped, tag = 'scoped memory for squeeze.1']
    #allocation2 [shape = 'u8[4096]{0}', space=vmem, size = 0x1000, scoped, tag = 'scoped mem for output reshape']
    #allocation3 [shape = 'u8[4096]{0}', space=vmem, size = 0x1000, scoped, tag = 'scoped mem for input reshape']
    %2 = vsyncpa [#allocation1], 0
    %s4 = sshllo.u32 0, 1
    %v5 = vld [vmem:[%s0] sm:%s4]
    %6 = vst [vmem:[#allocation3] sm:%s4] %v5
    %v7 = vld [vmem:[#allocation3] sm:$0x1]
    %vm8 = vcmask 130048
    %9 = vst.msk [vmem:[#allocation2] sm:$0x1] %vm8, %v7
    %v10 = vld [vmem:[#allocation3] sm:$0x1]
    %11 = vrot.lane.b32.xlu0 %v10, 112
    %v12 = vpop.permute.xlu0 %11
    %vm13 = vcmask 130048
    %s14 = scalar_lea.vmem [#allocation2], 1
    %15 = vst.msk [vmem:[%s14] sm:$0x1] %vm13, %v12
    %s17 = sshllo.u32 0, 2
    %v19 = vld [vmem:[#allocation2] sm:%s17]
    %s20 = sshllo.u32 0, 2
    %21 = vst [vmem:[#allocation0] sm:%s20] %v19
    %s23 = ssub.s32 32, 32
    %24 = vsyncadd [#allocation1], %s23
    %s26 = sshll.u32 [#allocation0], 4
    %s27 = int_to_ptr.vmem [resolvable:$true] %s26
    %29 = dma.vmem_to_hbm [thread:$0]  %s27, 32, %s1, [#allocation1]
    %30 = dma.done [#allocation1], 32
    %31 = vsyncpa [#allocation1], 1

// kernel: cnn_decoder_forward.1
$region0: #{cnn_decoder_forward.1}
  #allocation0 [shape = 'u32[]', space=smem, size = 0x4, offset = 0x4, fixed_abs, tag = 'smem constant byte address 0x4 - core index']
  #allocation1 [shape = 'u32[144,128]{1,0:T(1,128)}', space=vmem, size = 0x12000, scoped, tag = 'internal scratch']
  #allocation2 [shape = 'f32[40,32]{1,0:T(8,128)}', space=vmem, size = 0x5000, scoped, tag = 'scratch operand']
  #allocation3 [shape = 'f32[40,32]{1,0:T(8,128)}', space=vmem, size = 0x5000, scoped, tag = 'scratch operand']
  %s0 = inlined_call_operand.hbm [shape: f32[2,8], index: 0, kind: input, shape index: {}]
  %s1 = inlined_call_operand.hbm [shape: f32[16,32,32], index: 1, kind: input, shape index: {}]
  %s2 = inlined_call_operand.hbm [shape: f32[32,32], index: 2, kind: input, shape index: {}]
  %s3 = inlined_call_operand.hbm [shape: f32[6,32,96], index: 3, kind: input, shape index: {}]
  %s4 = inlined_call_operand.vmem [shape: f32[6,1,32], index: 4, kind: input, shape index: {}]
  %s5 = inlined_call_operand.vmem [shape: f32[32,32], index: 5, kind: output, shape index: {}]
  %s6 = sld [smem:[#allocation0]]
  $region46: #{cnn_decoder_forward.1} parent=0
    _
  %s8 = ssub.s32 1, %s6
  %s9 = scalar_select 0, %s8, %s6
  $region1: #{cnn_decoder_forward.1} parent=0
    #allocation4 [shape = 'u8[1024]{0}', space=smem, size = 0x400, scoped, tag = 'input window, operand 0, single buffered']
    #allocation5 [shape = 's32[1]{0}', space=sflag, size = 0x4, scoped, tag = 'scoped memory for cnn_decoder_forward.1']
    #allocation6 [shape = 's32[1]{0}', space=sflag, size = 0x4, scoped, tag = 'scoped memory for cnn_decoder_forward.1']
    #allocation7 [shape = 'u8[262144]{0}', space=vmem, size = 0x40000, scoped, tag = 'input window, operand 1, single buffered']
    #allocation8 [shape = 'u8[16384]{0}', space=vmem, size = 0x4000, scoped, tag = 'input window, operand 2, single buffered']
    #allocation9 [shape = 's32[1]{0}', space=sflag, size = 0x4, scoped, tag = 'scoped memory for cnn_decoder_forward.1']
    #allocation10 [shape = 'u8[98304]{0}', space=vmem, size = 0x18000, scoped, tag = 'input window, operand 3, single buffered']
    %10 = vsyncpa [#allocation6], 0
    %11 = vsyncpa [#allocation5], 0
    %12 = vsyncpa [#allocation9], 0
    // Predicated region
    $region2: #{cnn_decoder_forward.1} parent=1 // pred_check
      _
    $region3: #{cnn_decoder_forward.1} parent=1 // pred_check_branch
      %14 = sbr.rel (0) target = $region5
    $region4: #{cnn_decoder_forward.1} parent=1 // pred_region
      %s16 = ssub.s32 32, 32
      %17 = vsyncadd [#allocation6], %s16
      %20 = dma.hbm_to_smem %s0, 32, [#allocation4], [#allocation6]
    $region5: #{cnn_decoder_forward.1} parent=1 // pred_fallthru
      _
    // Predicated region
    $region6: #{cnn_decoder_forward.1} parent=1 // pred_check
      _
    $region7: #{cnn_decoder_forward.1} parent=1 // pred_check_branch
      %22 = sbr.rel (0) target = $region9
    $region8: #{cnn_decoder_forward.1} parent=1 // pred_region
      %s24 = ssub.s32 8192, 8192
      %25 = vsyncadd [#allocation5], %s24
      %s26 = sshll.u32 [#allocation7], 4
      %s27 = int_to_ptr.vmem [resolvable:$true] %s26
      %32 = dma.hbm_to_vmem [thread:$0]  %s1, 8192, %s27, [#allocation5], 128, 128, 8
    $region9: #{cnn_decoder_forward.1} parent=1 // pred_fallthru
      _
    // Predicated region
    $region10: #{cnn_decoder_forward.1} parent=1 // pred_check
      _
    $region11: #{cnn_decoder_forward.1} parent=1 // pred_check_branch
      %34 = sbr.rel (0) target = $region13
    $region12: #{cnn_decoder_forward.1} parent=1 // pred_region
      %s36 = ssub.s32 512, 512
      %37 = vsyncadd [#allocation9], %s36
      %s38 = sshll.u32 [#allocation8], 4
      %s39 = int_to_ptr.vmem [resolvable:$true] %s38
      %44 = dma.hbm_to_vmem [thread:$0]  %s2, 512, %s39, [#allocation9], 128, 128, 8
    $region13: #{cnn_decoder_forward.1} parent=1 // pred_fallthru
      _
    // Predicated region
    $region14: #{cnn_decoder_forward.1} parent=1 // pred_check
      _
    $region15: #{cnn_decoder_forward.1} parent=1 // pred_check_branch
      %46 = sbr.rel (0) target = $region17
    $region16: #{cnn_decoder_forward.1} parent=1 // pred_region
      %s48 = ssub.s32 3072, 3072
      %49 = vsyncadd [#allocation9], %s48
      %s50 = sshll.u32 [#allocation10], 4
      %s51 = int_to_ptr.vmem [resolvable:$true] %s50
      %56 = dma.hbm_to_vmem [thread:$0]  %s3, 3072, %s51, [#allocation9], 128, 128, 8
    $region17: #{cnn_decoder_forward.1} parent=1 // pred_fallthru
      _
    // Predicated region
    $region18: #{cnn_decoder_forward.1} parent=1 // pred_check
      _
    $region19: #{cnn_decoder_forward.1} parent=1 // pred_check_branch
      %58 = sbr.rel (0) target = $region21
    $region20: #{cnn_decoder_forward.1} parent=1 // pred_region
      _
    $region21: #{cnn_decoder_forward.1} parent=1 // pred_fallthru
      _
    // Predicated region
    $region22: #{cnn_decoder_forward.1} parent=1 // pred_check
      _
    $region23: #{cnn_decoder_forward.1} parent=1 // pred_check_branch
      %60 = sbr.rel (0) target = $region25
    $region24: #{cnn_decoder_forward.1} parent=1 // pred_region
      %61 = dma.done [#allocation6], 32
    $region25: #{cnn_decoder_forward.1} parent=1 // pred_fallthru
      _
    // Predicated region
    $region26: #{cnn_decoder_forward.1} parent=1 // pred_check
      _
    $region27: #{cnn_decoder_forward.1} parent=1 // pred_check_branch
      %63 = sbr.rel (0) target = $region29
    $region28: #{cnn_decoder_forward.1} parent=1 // pred_region
      %64 = dma.done [#allocation5], 8192
    $region29: #{cnn_decoder_forward.1} parent=1 // pred_fallthru
      _
    // Predicated region
    $region30: #{cnn_decoder_forward.1} parent=1 // pred_check
      _
    $region31: #{cnn_decoder_forward.1} parent=1 // pred_check_branch
      %66 = sbr.rel (0) target = $region33
    $region32: #{cnn_decoder_forward.1} parent=1 // pred_region
      %67 = dma.done [#allocation9], 512
    $region33: #{cnn_decoder_forward.1} parent=1 // pred_fallthru
      _
    // Predicated region
    $region34: #{cnn_decoder_forward.1} parent=1 // pred_check
      _
    $region35: #{cnn_decoder_forward.1} parent=1 // pred_check_branch
      %69 = sbr.rel (0) target = $region37
    $region36: #{cnn_decoder_forward.1} parent=1 // pred_region
      %70 = dma.done [#allocation9], 3072
    $region37: #{cnn_decoder_forward.1} parent=1 // pred_fallthru
      _
    %71 = sfence
    %vm72 = vcmask 261120
    %73 = vst.msk [vmem:[#allocation2] sm:$0xff] %vm72, 0.0
    %74 = vst.msk [vmem:[#allocation2 + $0x8] sm:$0xff] %vm72, 0.0
    %75 = vst.msk [vmem:[#allocation2 + $0x10] sm:$0xff] %vm72, 0.0
    %76 = vst.msk [vmem:[#allocation2 + $0x18] sm:$0xff] %vm72, 0.0
    %77 = vst.msk [vmem:[#allocation2 + $0x20] sm:$0xff] %vm72, 0.0
    %78 = vst.msk [vmem:[#allocation3] sm:$0xff] %vm72, 0.0
    %79 = vst.msk [vmem:[#allocation3 + $0x8] sm:$0xff] %vm72, 0.0
    %80 = vst.msk [vmem:[#allocation3 + $0x10] sm:$0xff] %vm72, 0.0
    %81 = vst.msk [vmem:[#allocation3 + $0x18] sm:$0xff] %vm72, 0.0
    %82 = vst.msk [vmem:[#allocation3 + $0x20] sm:$0xff] %vm72, 0.0
    %v83 = vlaneseq
    %v84 = vshrl.u32 %v83, 7
    %v85 = vadd.s32 %v84, 8
    %v86 = vadd.s32 %v84, 16
    %v87 = vadd.s32 %v84, 24
    %vm88 = vcmp.lt.s32.totalorder %v84, 0
    %v89 = vsub.s32 0, %v84
    %v90 = vsel %vm88, %v89, %v84
    %v91 = vshrl.u32 %v90, 4
    %v92 = vand.u32 %v90, 15
    %v93 = vsub.s32 0, %v92
    %v94 = vsel %vm88, %v93, %v92
    %vm95 = vcmp.lt.s32.totalorder %v85, 0
    %v96 = vsub.s32 0, %v85
    %v97 = vsel %vm95, %v96, %v85
    %v98 = vshrl.u32 %v97, 4
    %v99 = vand.u32 %v97, 15
    %v100 = vsub.s32 0, %v99
    %v101 = vsel %vm95, %v100, %v99
    %vm102 = vcmp.lt.s32.totalorder %v86, 0
    %v103 = vsub.s32 0, %v86
    %v104 = vsel %vm102, %v103, %v86
    %v105 = vshrl.u32 %v104, 4
    %v106 = vand.u32 %v104, 15
    %v107 = vsub.s32 0, %v106
    %v108 = vsel %vm102, %v107, %v106
    %vm109 = vcmp.lt.s32.totalorder %v87, 0
    %v110 = vsub.s32 0, %v87
    %v111 = vsel %vm109, %v110, %v87
    %v112 = vshrl.u32 %v111, 4
    %v113 = vand.u32 %v111, 15
    %v114 = vsub.s32 0, %v113
    %v115 = vsel %vm109, %v114, %v113
    %vm116 = vcmp.ne.s32.totalorder %v94, 0
    %vm117 = vcmp.ne.s32.totalorder %v101, 0
    %vm118 = vcmp.ne.s32.totalorder %v108, 0
    %vm119 = vcmp.ne.s32.totalorder %v115, 0
    %vm120 = vcmp.lt.s32.totalorder %v94, 0
    %vm121 = vcmp.lt.s32.totalorder %v101, 0
    %vm122 = vcmp.lt.s32.totalorder %v108, 0
    %vm123 = vcmp.lt.s32.totalorder %v115, 0
    %vm124 = vmand %vm120, %vm116
    %vm125 = vmand %vm121, %vm117
    %vm126 = vmand %vm122, %vm118
    %vm127 = vmand %vm123, %vm119
    %v128 = vadd.s32 %v94, 16
    %v129 = vadd.s32 %v101, 16
    %v130 = vadd.s32 %v108, 16
    %v131 = vadd.s32 %v115, 16
    %v132 = vsel %vm124, %v128, %v94
    %v133 = vsel %vm125, %v129, %v101
    %v134 = vsel %vm126, %v130, %v108
    %v135 = vsel %vm127, %v131, %v115
    %vm136 = vcmp.ne.s32.totalorder %v132, 0
    %vm137 = vcmp.ne.s32.totalorder %v133, 0
    %vm138 = vcmp.ne.s32.totalorder %v134, 0
    %vm139 = vcmp.ne.s32.totalorder %v135, 0
    %v140 = vsel %vm136, 1, 0
    %v141 = vsel %vm137, 1, 0
    %v142 = vsel %vm138, 1, 0
    %v143 = vsel %vm139, 1, 0
    %v144 = vcvt.s32.f32 %v140
    %v145 = vcvt.s32.f32 %v141
    %v146 = vcvt.s32.f32 %v142
    %v147 = vcvt.s32.f32 %v143
    %vm148 = vcmp.ne.s32.totalorder %v132, 15
    %vm149 = vcmp.ne.s32.totalorder %v133, 15
    %vm150 = vcmp.ne.s32.totalorder %v134, 15
    %vm151 = vcmp.ne.s32.totalorder %v135, 15
    %v152 = vsel %vm148, 1, 0
    %v153 = vsel %vm149, 1, 0
    %v154 = vsel %vm150, 1, 0
    %v155 = vsel %vm151, 1, 0
    %v156 = vcvt.s32.f32 %v152
    %v157 = vcvt.s32.f32 %v153
    %v158 = vcvt.s32.f32 %v154
    %v159 = vcvt.s32.f32 %v155
    %v160 = vld [vmem:[#allocation8] sm:$0xff]
    %v161 = vld [vmem:[#allocation8 + $0x8] sm:$0xff]
    %v162 = vld [vmem:[#allocation8 + $0x10] sm:$0xff]
    %v163 = vld [vmem:[#allocation8 + $0x18] sm:$0xff]
    %s164 = sld [smem:[#allocation4]]
    %v165 = vld [vmem:[#allocation7] sm:$0xff]
    %v166 = vld [vmem:[#allocation7 + $0x8] sm:$0xff]
    %v167 = vld [vmem:[#allocation7 + $0x10] sm:$0xff]
    %v168 = vld [vmem:[#allocation7 + $0x18] sm:$0xff]
    %v169 = vstv %s164
    %v170 = vmul.f32 %v169, %v165
    %v171 = vmul.f32 %v169, %v166
    %v172 = vmul.f32 %v169, %v167
    %v173 = vmul.f32 %v169, %v168
    %v174 = vadd.f32 %v160, %v170
    %v175 = vadd.f32 %v161, %v171
    %v176 = vadd.f32 %v162, %v172
    %v177 = vadd.f32 %v163, %v173
    %s178 = sld [smem:[#allocation4 + $0x1]]
    %s179 = scalar_lea.vmem [#allocation7], 32
    %v180 = vld [vmem:[%s179] sm:$0xff]
    %v181 = vld [vmem:[%s179 + $0x8] sm:$0xff]
    %v182 = vld [vmem:[%s179 + $0x10] sm:$0xff]
    %v183 = vld [vmem:[%s179 + $0x18] sm:$0xff]
    %v184 = vstv %s178
    %v185 = vmul.f32 %v184, %v180
    %v186 = vmul.f32 %v184, %v181
    %v187 = vmul.f32 %v184, %v182
    %v188 = vmul.f32 %v184, %v183
    %v189 = vadd.f32 %v174, %v185
    %v190 = vadd.f32 %v175, %v186
    %v191 = vadd.f32 %v176, %v187
    %v192 = vadd.f32 %v177, %v188
    %s193 = sld [smem:[#allocation4 + $0x2]]
    %s194 = scalar_lea.vmem [#allocation7], 64
    %v195 = vld [vmem:[%s194] sm:$0xff]
    %v196 = vld [vmem:[%s194 + $0x8] sm:$0xff]
    %v197 = vld [vmem:[%s194 + $0x10] sm:$0xff]
    %v198 = vld [vmem:[%s194 + $0x18] sm:$0xff]
    %v199 = vstv %s193
    %v200 = vmul.f32 %v199, %v195
    %v201 = vmul.f32 %v199, %v196
    %v202 = vmul.f32 %v199, %v197
    %v203 = vmul.f32 %v199, %v198
    %v204 = vadd.f32 %v189, %v200
    %v205 = vadd.f32 %v190, %v201
    %v206 = vadd.f32 %v191, %v202
    %v207 = vadd.f32 %v192, %v203
    %s208 = sld [smem:[#allocation4 + $0x3]]
    %s209 = scalar_lea.vmem [#allocation7], 96
    %v210 = vld [vmem:[%s209] sm:$0xff]
    %v211 = vld [vmem:[%s209 + $0x8] sm:$0xff]
    %v212 = vld [vmem:[%s209 + $0x10] sm:$0xff]
    %v213 = vld [vmem:[%s209 + $0x18] sm:$0xff]
    %v214 = vstv %s208
    %v215 = vmul.f32 %v214, %v210
    %v216 = vmul.f32 %v214, %v211
    %v217 = vmul.f32 %v214, %v212
    %v218 = vmul.f32 %v214, %v213
    %v219 = vadd.f32 %v204, %v215
    %v220 = vadd.f32 %v205, %v216
    %v221 = vadd.f32 %v206, %v217
    %v222 = vadd.f32 %v207, %v218
    %s223 = sld [smem:[#allocation4 + $0x4]]
    %s224 = scalar_lea.vmem [#allocation7], 128
    %v225 = vld [vmem:[%s224] sm:$0xff]
    %v226 = vld [vmem:[%s224 + $0x8] sm:$0xff]
    %v227 = vld [vmem:[%s224 + $0x10] sm:$0xff]
    %v228 = vld [vmem:[%s224 + $0x18] sm:$0xff]
    %v229 = vstv %s223
    %v230 = vmul.f32 %v229, %v225
    %v231 = vmul.f32 %v229, %v226
    %v232 = vmul.f32 %v229, %v227
    %v233 = vmul.f32 %v229, %v228
    %v234 = vadd.f32 %v219, %v230
    %v235 = vadd.f32 %v220, %v231
    %v236 = vadd.f32 %v221, %v232
    %v237 = vadd.f32 %v222, %v233
    %s238 = sld [smem:[#allocation4 + $0x5]]
    %s239 = scalar_lea.vmem [#allocation7], 160
    %v240 = vld [vmem:[%s239] sm:$0xff]
    %v241 = vld [vmem:[%s239 + $0x8] sm:$0xff]
    %v242 = vld [vmem:[%s239 + $0x10] sm:$0xff]
    %v243 = vld [vmem:[%s239 + $0x18] sm:$0xff]
    %v244 = vstv %s238
    %v245 = vmul.f32 %v244, %v240
    %v246 = vmul.f32 %v244, %v241
    %v247 = vmul.f32 %v244, %v242
    %v248 = vmul.f32 %v244, %v243
    %v249 = vadd.f32 %v234, %v245
    %v250 = vadd.f32 %v235, %v246
    %v251 = vadd.f32 %v236, %v247
    %v252 = vadd.f32 %v237, %v248
    %s253 = sld [smem:[#allocation4 + $0x6]]
    %s254 = scalar_lea.vmem [#allocation7], 192
    %v255 = vld [vmem:[%s254] sm:$0xff]
    %v256 = vld [vmem:[%s254 + $0x8] sm:$0xff]
    %v257 = vld [vmem:[%s254 + $0x10] sm:$0xff]
    %v258 = vld [vmem:[%s254 + $0x18] sm:$0xff]
    %v259 = vstv %s253
    %v260 = vmul.f32 %v259, %v255
    %v261 = vmul.f32 %v259, %v256
    %v262 = vmul.f32 %v259, %v257
    %v263 = vmul.f32 %v259, %v258
    %v264 = vadd.f32 %v249, %v260
    %v265 = vadd.f32 %v250, %v261
    %v266 = vadd.f32 %v251, %v262
    %v267 = vadd.f32 %v252, %v263
    %s268 = sld [smem:[#allocation4 + $0x7]]
    %s269 = scalar_lea.vmem [#allocation7], 224
    %v270 = vld [vmem:[%s269] sm:$0xff]
    %v271 = vld [vmem:[%s269 + $0x8] sm:$0xff]
    %v272 = vld [vmem:[%s269 + $0x10] sm:$0xff]
    %v273 = vld [vmem:[%s269 + $0x18] sm:$0xff]
    %v274 = vstv %s268
    %v275 = vmul.f32 %v274, %v270
    %v276 = vmul.f32 %v274, %v271
    %v277 = vmul.f32 %v274, %v272
    %v278 = vmul.f32 %v274, %v273
    %v279 = vadd.f32 %v264, %v275
    %v280 = vadd.f32 %v265, %v276
    %v281 = vadd.f32 %v266, %v277
    %v282 = vadd.f32 %v267, %v278
    %s283 = sld [smem:[#allocation4 + $0x80]]
    %s284 = scalar_lea.vmem [#allocation7], 256
    %v285 = vld [vmem:[%s284] sm:$0xff]
    %v286 = vld [vmem:[%s284 + $0x8] sm:$0xff]
    %v287 = vld [vmem:[%s284 + $0x10] sm:$0xff]
    %v288 = vld [vmem:[%s284 + $0x18] sm:$0xff]
    %v289 = vstv %s283
    %v290 = vmul.f32 %v289, %v285
    %v291 = vmul.f32 %v289, %v286
    %v292 = vmul.f32 %v289, %v287
    %v293 = vmul.f32 %v289, %v288
    %v294 = vadd.f32 %v279, %v290
    %v295 = vadd.f32 %v280, %v291
    %v296 = vadd.f32 %v281, %v292
    %v297 = vadd.f32 %v282, %v293
    %s298 = sld [smem:[#allocation4 + $0x81]]
    %s299 = scalar_lea.vmem [#allocation7], 288
    %v300 = vld [vmem:[%s299] sm:$0xff]
    %v301 = vld [vmem:[%s299 + $0x8] sm:$0xff]
    %v302 = vld [vmem:[%s299 + $0x10] sm:$0xff]
    %v303 = vld [vmem:[%s299 + $0x18] sm:$0xff]
    %v304 = vstv %s298
    %v305 = vmul.f32 %v304, %v300
    %v306 = vmul.f32 %v304, %v301
    %v307 = vmul.f32 %v304, %v302
    %v308 = vmul.f32 %v304, %v303
    %v309 = vadd.f32 %v294, %v305
    %v310 = vadd.f32 %v295, %v306
    %v311 = vadd.f32 %v296, %v307
    %v312 = vadd.f32 %v297, %v308
    %s313 = sld [smem:[#allocation4 + $0x82]]
    %s314 = scalar_lea.vmem [#allocation7], 320
    %v315 = vld [vmem:[%s314] sm:$0xff]
    %v316 = vld [vmem:[%s314 + $0x8] sm:$0xff]
    %v317 = vld [vmem:[%s314 + $0x10] sm:$0xff]
    %v318 = vld [vmem:[%s314 + $0x18] sm:$0xff]
    %v319 = vstv %s313
    %v320 = vmul.f32 %v319, %v315
    %v321 = vmul.f32 %v319, %v316
    %v322 = vmul.f32 %v319, %v317
    %v323 = vmul.f32 %v319, %v318
    %v324 = vadd.f32 %v309, %v320
    %v325 = vadd.f32 %v310, %v321
    %v326 = vadd.f32 %v311, %v322
    %v327 = vadd.f32 %v312, %v323
    %s328 = sld [smem:[#allocation4 + $0x83]]
    %s329 = scalar_lea.vmem [#allocation7], 352
    %v330 = vld [vmem:[%s329] sm:$0xff]
    %v331 = vld [vmem:[%s329 + $0x8] sm:$0xff]
    %v332 = vld [vmem:[%s329 + $0x10] sm:$0xff]
    %v333 = vld [vmem:[%s329 + $0x18] sm:$0xff]
    %v334 = vstv %s328
    %v335 = vmul.f32 %v334, %v330
    %v336 = vmul.f32 %v334, %v331
    %v337 = vmul.f32 %v334, %v332
    %v338 = vmul.f32 %v334, %v333
    %v339 = vadd.f32 %v324, %v335
    %v340 = vadd.f32 %v325, %v336
    %v341 = vadd.f32 %v326, %v337
    %v342 = vadd.f32 %v327, %v338
    %s343 = sld [smem:[#allocation4 + $0x84]]
    %s344 = scalar_lea.vmem [#allocation7], 384
    %v345 = vld [vmem:[%s344] sm:$0xff]
    %v346 = vld [vmem:[%s344 + $0x8] sm:$0xff]
    %v347 = vld [vmem:[%s344 + $0x10] sm:$0xff]
    %v348 = vld [vmem:[%s344 + $0x18] sm:$0xff]
    %v349 = vstv %s343
    %v350 = vmul.f32 %v349, %v345
    %v351 = vmul.f32 %v349, %v346
    %v352 = vmul.f32 %v349, %v347
    %v353 = vmul.f32 %v349, %v348
    %v354 = vadd.f32 %v339, %v350
    %v355 = vadd.f32 %v340, %v351
    %v356 = vadd.f32 %v341, %v352
    %v357 = vadd.f32 %v342, %v353
    %s358 = sld [smem:[#allocation4 + $0x85]]
    %s359 = scalar_lea.vmem [#allocation7], 416
    %v360 = vld [vmem:[%s359] sm:$0xff]
    %v361 = vld [vmem:[%s359 + $0x8] sm:$0xff]
    %v362 = vld [vmem:[%s359 + $0x10] sm:$0xff]
    %v363 = vld [vmem:[%s359 + $0x18] sm:$0xff]
    %v364 = vstv %s358
    %v365 = vmul.f32 %v364, %v360
    %v366 = vmul.f32 %v364, %v361
    %v367 = vmul.f32 %v364, %v362
    %v368 = vmul.f32 %v364, %v363
    %v369 = vadd.f32 %v354, %v365
    %v370 = vadd.f32 %v355, %v366
    %v371 = vadd.f32 %v356, %v367
    %v372 = vadd.f32 %v357, %v368
    %s373 = sld [smem:[#allocation4 + $0x86]]
    %s374 = scalar_lea.vmem [#allocation7], 448
    %v375 = vld [vmem:[%s374] sm:$0xff]
    %v376 = vld [vmem:[%s374 + $0x8] sm:$0xff]
    %v377 = vld [vmem:[%s374 + $0x10] sm:$0xff]
    %v378 = vld [vmem:[%s374 + $0x18] sm:$0xff]
    %v379 = vstv %s373
    %v380 = vmul.f32 %v379, %v375
    %v381 = vmul.f32 %v379, %v376
    %v382 = vmul.f32 %v379, %v377
    %v383 = vmul.f32 %v379, %v378
    %v384 = vadd.f32 %v369, %v380
    %v385 = vadd.f32 %v370, %v381
    %v386 = vadd.f32 %v371, %v382
    %v387 = vadd.f32 %v372, %v383
    %s388 = sld [smem:[#allocation4 + $0x87]]
    %s389 = scalar_lea.vmem [#allocation7], 480
    %v390 = vld [vmem:[%s389] sm:$0xff]
    %v391 = vld [vmem:[%s389 + $0x8] sm:$0xff]
    %v392 = vld [vmem:[%s389 + $0x10] sm:$0xff]
    %v393 = vld [vmem:[%s389 + $0x18] sm:$0xff]
    %v394 = vstv %s388
    %v395 = vmul.f32 %v394, %v390
    %v396 = vmul.f32 %v394, %v391
    %v397 = vmul.f32 %v394, %v392
    %v398 = vmul.f32 %v394, %v393
    %v399 = vadd.f32 %v384, %v395
    %v400 = vadd.f32 %v385, %v396
    %v401 = vadd.f32 %v386, %v397
    %v402 = vadd.f32 %v387, %v398
    %v403 = vmax.f32 %v399, 0.0
    %v404 = vmax.f32 %v400, 0.0
    %v405 = vmax.f32 %v401, 0.0
    %v406 = vmax.f32 %v402, 0.0
    %v407 = vld [vmem:[#allocation10] sm:$0xff]
    %v408 = vld [vmem:[#allocation10 + $0x8] sm:$0xff]
    %v409 = vld [vmem:[#allocation10 + $0x10] sm:$0xff]
    %v410 = vld [vmem:[#allocation10 + $0x18] sm:$0xff]
    %v412 = vsel %vm72, %v403, 0
    %v415 = vsel %vm72, %v404, 0
    %v418 = vsel %vm72, %v405, 0
    %v421 = vsel %vm72, %v406, 0
    %423 = vmatprep.subr.mxu0 0.0
    %424 = vmatpush1.msra.mxu0 %v407
    %425 = vmatprep.subr.mxu0 0.0
    %426 = vmatpush1.msra.mxu0 %v408
    %427 = vmatprep.subr.mxu0 0.0
    %428 = vmatpush1.msra.mxu0 %v409
    %429 = vmatprep.subr.mxu0 0.0
    %430 = vmatpush1.msra.mxu0 %v410
    %431 = vmatprep.subr.mxu0 0.0
    %432 = vmatpush1.msra.mxu0 0.0
    %433 = vmatprep.subr.mxu0 0.0
    %434 = vmatpush1.msra.mxu0 0.0
    %435 = vmatprep.subr.mxu0 0.0
    %436 = vmatpush1.msra.mxu0 0.0
    %437 = vmatprep.subr.mxu0 0.0
    %438 = vmatpush1.msra.mxu0 0.0
    %439 = vmatprep.subr.mxu0 0.0
    %440 = vmatpush1.msra.mxu0 0.0
    %441 = vmatprep.subr.mxu0 0.0
    %442 = vmatpush1.msra.mxu0 0.0
    %443 = vmatprep.subr.mxu0 0.0
    %444 = vmatpush1.msra.mxu0 0.0
    %445 = vmatprep.subr.mxu0 0.0
    %446 = vmatpush1.msra.mxu0 0.0
    %447 = vmatprep.subr.mxu0 0.0
    %448 = vmatpush1.msra.mxu0 0.0
    %449 = vmatprep.subr.mxu0 0.0
    %450 = vmatpush1.msra.mxu0 0.0
    %451 = vmatprep.subr.mxu0 0.0
    %452 = vmatpush1.msra.mxu0 0.0
    %453 = vmatprep.subr.mxu0 0.0
    %454 = vmatpush1.msra.mxu0 0.0
    %455 = vmatprep.subr.mxu0 0.0
    %456 = vmatpush1.msra.mxu0 0.0
    %457 = vmatprep.subr.mxu0 0.0
    %458 = vmatpush1.msra.mxu0 0.0
    %459 = vmatprep.subr.mxu0 0.0
    %460 = vmatpush1.msra.mxu0 0.0
    %461 = vmatprep.subr.mxu0 0.0
    %462 = vmatpush1.msra.mxu0 0.0
    %463 = vmatprep.subr.mxu0 0.0
    %464 = vmatpush1.msra.mxu0 0.0
    %465 = vmatprep.subr.mxu0 0.0
    %466 = vmatpush1.msra.mxu0 0.0
    %467 = vmatprep.subr.mxu0 0.0
    %468 = vmatpush1.msra.mxu0 0.0
    %469 = vmatprep.subr.mxu0 0.0
    %470 = vmatpush1.msra.mxu0 0.0
    %471 = vmatprep.subr.mxu0 0.0
    %472 = vmatpush1.msra.mxu0 0.0
    %473 = vmatprep.subr.mxu0 0.0
    %474 = vmatpush1.msra.mxu0 0.0
    %475 = vmatprep.subr.mxu0 0.0
    %476 = vmatpush1.msra.mxu0 0.0
    %477 = vmatprep.subr.mxu0 0.0
    %478 = vmatpush1.msra.mxu0 0.0
    %479 = vmatprep.subr.mxu0 0.0
    %480 = vmatpush1.msra.mxu0 0.0
    %481 = vmatprep.subr.mxu0 0.0
    %482 = vmatpush1.msra.mxu0 0.0
    %483 = vmatprep.subr.mxu0 0.0
    %484 = vmatpush1.msra.mxu0 0.0
    %485 = vmatprep.subr.mxu0 0.0
    %486 = vmatpush1.msra.mxu0 0.0
    %487 = vmatprep.mubr.f32.mxu0 0.0
    %488 = vmatmul.mubr.f32.gmra.mrb[0].mxu0 %v412
    %v489 = vpop.f32.mrb[0].mxu0
    %v490 = vadd.f32 0.0, %v489
    %v491 = vpop.f32.mrb[0].mxu0
    %492 = vmatprep.mubr.f32.mxu0 0.0
    %493 = vmatmul.mubr.f32.gmra.mrb[0].mxu0 %v415
    %v494 = vpop.f32.mrb[0].mxu0
    %v495 = vadd.f32 0.0, %v494
    %v496 = vpop.f32.mrb[0].mxu0
    %497 = vmatprep.mubr.f32.mxu0 0.0
    %498 = vmatmul.mubr.f32.gmra.mrb[0].mxu0 %v418
    %v499 = vpop.f32.mrb[0].mxu0
    %v500 = vadd.f32 0.0, %v499
    %v501 = vpop.f32.mrb[0].mxu0
    %502 = vmatprep.mubr.f32.mxu0 0.0
    %503 = vmatmul.mubr.f32.gmra.mrb[0].mxu0 %v421
    %v504 = vpop.f32.mrb[0].mxu0
    %v505 = vadd.f32 0.0, %v504
    %v506 = vpop.f32.mrb[0].mxu0
    %507 = vdwg.mxu0
    %508 = vst.msk [vmem:[#allocation2 + $0x8] sm:$0xff] %vm72, %v490
    %509 = vst.msk [vmem:[#allocation2 + $0x10] sm:$0xff] %vm72, %v495
    %510 = vst.msk [vmem:[#allocation2 + $0x18] sm:$0xff] %vm72, %v500
    %511 = vst.msk [vmem:[#allocation2 + $0x20] sm:$0xff] %vm72, %v505
    %516 = vrot.lane.b32.xlu0 %v490, 64
    %v517 = vpop.permute.xlu0 %516
    %518 = vrot.lane.b32.xlu0 %v495, 64
    %v519 = vpop.permute.xlu0 %518
    %520 = vrot.lane.b32.xlu0 %v500, 64
    %v521 = vpop.permute.xlu0 %520
    %522 = vrot.lane.b32.xlu0 %v505, 64
    %v523 = vpop.permute.xlu0 %522
    %528 = vst.msk [vmem:[#allocation3] sm:$0xff] %vm72, %v517
    %529 = vst.msk [vmem:[#allocation3 + $0x8] sm:$0xff] %vm72, %v519
    %530 = vst.msk [vmem:[#allocation3 + $0x10] sm:$0xff] %vm72, %v521
    %531 = vst.msk [vmem:[#allocation3 + $0x18] sm:$0xff] %vm72, %v523
    %v532 = vld [vmem:[#allocation2 + $0x7] sm:$0xff]
    %v533 = vld [vmem:[#allocation2 + $0xf] sm:$0xff]
    %v534 = vld [vmem:[#allocation2 + $0x17] sm:$0xff]
    %v535 = vld [vmem:[#allocation2 + $0x1f] sm:$0xff]
    %v536 = vld [vmem:[#allocation3 + $0x1] sm:$0xff]
    %v537 = vld [vmem:[#allocation3 + $0x9] sm:$0xff]
    %v538 = vld [vmem:[#allocation3 + $0x11] sm:$0xff]
    %v539 = vld [vmem:[#allocation3 + $0x19] sm:$0xff]
    %v540 = vmul.f32 %v532, %v144
    %v541 = vmul.f32 %v533, %v145
    %v542 = vmul.f32 %v534, %v146
    %v543 = vmul.f32 %v535, %v147
    %544 = vrot.lane.b32.xlu0 %v490, 96
    %v545 = vpop.permute.xlu0 %544
    %546 = vrot.lane.b32.xlu0 %v495, 96
    %v547 = vpop.permute.xlu0 %546
    %548 = vrot.lane.b32.xlu0 %v500, 96
    %v549 = vpop.permute.xlu0 %548
    %550 = vrot.lane.b32.xlu0 %v505, 96
    %v551 = vpop.permute.xlu0 %550
    %v556 = vadd.f32 %v540, %v545
    %v557 = vadd.f32 %v541, %v547
    %v558 = vadd.f32 %v542, %v549
    %v559 = vadd.f32 %v543, %v551
    %v560 = vmul.f32 %v536, %v156
    %v561 = vmul.f32 %v537, %v157
    %v562 = vmul.f32 %v538, %v158
    %v563 = vmul.f32 %v539, %v159
    %v564 = vadd.f32 %v556, %v560
    %v565 = vadd.f32 %v557, %v561
    %v566 = vadd.f32 %v558, %v562
    %v567 = vadd.f32 %v559, %v563
    %v568 = vld [vmem:[%s4] sm:$0x1]
    %v570 = vlaneseq
    %v571 = vshrl.u32 %v570, 7
    %v572 = vsub.s32 0, %v571
    %v573 = vrot.slane %v568, %v572
    %v575 = vadd.f32 %v564, %v573
    %v576 = vadd.f32 %v565, %v573
    %v577 = vadd.f32 %v566, %v573
    %v578 = vadd.f32 %v567, %v573
    %v579 = vmax.f32 %v575, 0.0
    %v580 = vmax.f32 %v576, 0.0
    %v581 = vmax.f32 %v577, 0.0
    %v582 = vmax.f32 %v578, 0.0
    %s583 = scalar_lea.vmem [#allocation10], 32
    %v584 = vld [vmem:[%s583] sm:$0xff]
    %v585 = vld [vmem:[%s583 + $0x8] sm:$0xff]
    %v586 = vld [vmem:[%s583 + $0x10] sm:$0xff]
    %v587 = vld [vmem:[%s583 + $0x18] sm:$0xff]
    %v589 = vsel %vm72, %v579, 0
    %v592 = vsel %vm72, %v580, 0
    %v595 = vsel %vm72, %v581, 0
    %v598 = vsel %vm72, %v582, 0
    %600 = vmatprep.subr.mxu0 0.0
    %601 = vmatpush1.msra.mxu0 %v584
    %602 = vmatprep.subr.mxu0 0.0
    %603 = vmatpush1.msra.mxu0 %v585
    %604 = vmatprep.subr.mxu0 0.0
    %605 = vmatpush1.msra.mxu0 %v586
    %606 = vmatprep.subr.mxu0 0.0
    %607 = vmatpush1.msra.mxu0 %v587
    %608 = vmatprep.subr.mxu0 0.0
    %609 = vmatpush1.msra.mxu0 0.0
    %610 = vmatprep.subr.mxu0 0.0
    %611 = vmatpush1.msra.mxu0 0.0
    %612 = vmatprep.subr.mxu0 0.0
    %613 = vmatpush1.msra.mxu0 0.0
    %614 = vmatprep.subr.mxu0 0.0
    %615 = vmatpush1.msra.mxu0 0.0
    %616 = vmatprep.subr.mxu0 0.0
    %617 = vmatpush1.msra.mxu0 0.0
    %618 = vmatprep.subr.mxu0 0.0
    %619 = vmatpush1.msra.mxu0 0.0
    %620 = vmatprep.subr.mxu0 0.0
    %621 = vmatpush1.msra.mxu0 0.0
    %622 = vmatprep.subr.mxu0 0.0
    %623 = vmatpush1.msra.mxu0 0.0
    %624 = vmatprep.subr.mxu0 0.0
    %625 = vmatpush1.msra.mxu0 0.0
    %626 = vmatprep.subr.mxu0 0.0
    %627 = vmatpush1.msra.mxu0 0.0
    %628 = vmatprep.subr.mxu0 0.0
    %629 = vmatpush1.msra.mxu0 0.0
    %630 = vmatprep.subr.mxu0 0.0
    %631 = vmatpush1.msra.mxu0 0.0
    %632 = vmatprep.subr.mxu0 0.0
    %633 = vmatpush1.msra.mxu0 0.0
    %634 = vmatprep.subr.mxu0 0.0
    %635 = vmatpush1.msra.mxu0 0.0
    %636 = vmatprep.subr.mxu0 0.0
    %637 = vmatpush1.msra.mxu0 0.0
    %638 = vmatprep.subr.mxu0 0.0
    %639 = vmatpush1.msra.mxu0 0.0
    %640 = vmatprep.subr.mxu0 0.0
    %641 = vmatpush1.msra.mxu0 0.0
    %642 = vmatprep.subr.mxu0 0.0
    %643 = vmatpush1.msra.mxu0 0.0
    %644 = vmatprep.subr.mxu0 0.0
    %645 = vmatpush1.msra.mxu0 0.0
    %646 = vmatprep.subr.mxu0 0.0
    %647 = vmatpush1.msra.mxu0 0.0
    %648 = vmatprep.subr.mxu0 0.0
    %649 = vmatpush1.msra.mxu0 0.0
    %650 = vmatprep.subr.mxu0 0.0
    %651 = vmatpush1.msra.mxu0 0.0
    %652 = vmatprep.subr.mxu0 0.0
    %653 = vmatpush1.msra.mxu0 0.0
    %654 = vmatprep.subr.mxu0 0.0
    %655 = vmatpush1.msra.mxu0 0.0
    %656 = vmatprep.subr.mxu0 0.0
    %657 = vmatpush1.msra.mxu0 0.0
    %658 = vmatprep.subr.mxu0 0.0
    %659 = vmatpush1.msra.mxu0 0.0
    %660 = vmatprep.subr.mxu0 0.0
    %661 = vmatpush1.msra.mxu0 0.0
    %662 = vmatprep.subr.mxu0 0.0
    %663 = vmatpush1.msra.mxu0 0.0
    %664 = vmatprep.mubr.f32.mxu0 0.0
    %665 = vmatmul.mubr.f32.gmra.mrb[0].mxu0 %v589
    %v666 = vpop.f32.mrb[0].mxu0
    %v667 = vadd.f32 0.0, %v666
    %v668 = vpop.f32.mrb[0].mxu0
    %669 = vmatprep.mubr.f32.mxu0 0.0
    %670 = vmatmul.mubr.f32.gmra.mrb[0].mxu0 %v592
    %v671 = vpop.f32.mrb[0].mxu0
    %v672 = vadd.f32 0.0, %v671
    %v673 = vpop.f32.mrb[0].mxu0
    %674 = vmatprep.mubr.f32.mxu0 0.0
    %675 = vmatmul.mubr.f32.gmra.mrb[0].mxu0 %v595
    %v676 = vpop.f32.mrb[0].mxu0
    %v677 = vadd.f32 0.0, %v676
    %v678 = vpop.f32.mrb[0].mxu0
    %679 = vmatprep.mubr.f32.mxu0 0.0
    %680 = vmatmul.mubr.f32.gmra.mrb[0].mxu0 %v598
    %v681 = vpop.f32.mrb[0].mxu0
    %v682 = vadd.f32 0.0, %v681
    %v683 = vpop.f32.mrb[0].mxu0
    %684 = vdwg.mxu0
    %685 = vst.msk [vmem:[#allocation2 + $0x8] sm:$0xff] %vm72, %v667
    %686 = vst.msk [vmem:[#allocation2 + $0x10] sm:$0xff] %vm72, %v672
    %687 = vst.msk [vmem:[#allocation2 + $0x18] sm:$0xff] %vm72, %v677
    %688 = vst.msk [vmem:[#allocation2 + $0x20] sm:$0xff] %vm72, %v682
    %693 = vrot.lane.b32.xlu0 %v667, 64
    %v694 = vpop.permute.xlu0 %693
    %695 = vrot.lane.b32.xlu0 %v672, 64
    %v696 = vpop.permute.xlu0 %695
    %697 = vrot.lane.b32.xlu0 %v677, 64
    %v698 = vpop.permute.xlu0 %697
    %699 = vrot.lane.b32.xlu0 %v682, 64
    %v700 = vpop.permute.xlu0 %699
    %705 = vst.msk [vmem:[#allocation3] sm:$0xff] %vm72, %v694
    %706 = vst.msk [vmem:[#allocation3 + $0x8] sm:$0xff] %vm72, %v696
    %707 = vst.msk [vmem:[#allocation3 + $0x10] sm:$0xff] %vm72, %v698
    %708 = vst.msk [vmem:[#allocation3 + $0x18] sm:$0xff] %vm72, %v700
    %v709 = vld [vmem:[#allocation2 + $0x7] sm:$0xff]
    %v710 = vld [vmem:[#allocation2 + $0xf] sm:$0xff]
    %v711 = vld [vmem:[#allocation2 + $0x17] sm:$0xff]
    %v712 = vld [vmem:[#allocation2 + $0x1f] sm:$0xff]
    %v713 = vld [vmem:[#allocation3 + $0x1] sm:$0xff]
    %v714 = vld [vmem:[#allocation3 + $0x9] sm:$0xff]
    %v715 = vld [vmem:[#allocation3 + $0x11] sm:$0xff]
    %v716 = vld [vmem:[#allocation3 + $0x19] sm:$0xff]
    %v717 = vmul.f32 %v709, %v144
    %v718 = vmul.f32 %v710, %v145
    %v719 = vmul.f32 %v711, %v146
    %v720 = vmul.f32 %v712, %v147
    %721 = vrot.lane.b32.xlu0 %v667, 96
    %v722 = vpop.permute.xlu0 %721
    %723 = vrot.lane.b32.xlu0 %v672, 96
    %v724 = vpop.permute.xlu0 %723
    %725 = vrot.lane.b32.xlu0 %v677, 96
    %v726 = vpop.permute.xlu0 %725
    %727 = vrot.lane.b32.xlu0 %v682, 96
    %v728 = vpop.permute.xlu0 %727
    %v733 = vadd.f32 %v717, %v722
    %v734 = vadd.f32 %v718, %v724
    %v735 = vadd.f32 %v719, %v726
    %v736 = vadd.f32 %v720, %v728
    %v737 = vmul.f32 %v713, %v156
    %v738 = vmul.f32 %v714, %v157
    %v739 = vmul.f32 %v715, %v158
    %v740 = vmul.f32 %v716, %v159
    %v741 = vadd.f32 %v733, %v737
    %v742 = vadd.f32 %v734, %v738
    %v743 = vadd.f32 %v735, %v739
    %v744 = vadd.f32 %v736, %v740
    %s745 = scalar_lea.vmem %s4, 1
    %v746 = vld [vmem:[%s745] sm:$0x1]
    %v748 = vlaneseq
    %v749 = vshrl.u32 %v748, 7
    %v750 = vsub.s32 0, %v749
    %v751 = vrot.slane %v746, %v750
    %v753 = vadd.f32 %v741, %v751
    %v754 = vadd.f32 %v742, %v751
    %v755 = vadd.f32 %v743, %v751
    %v756 = vadd.f32 %v744, %v751
    %v757 = vmax.f32 %v753, 0.0
    %v758 = vmax.f32 %v754, 0.0
    %v759 = vmax.f32 %v755, 0.0
    %v760 = vmax.f32 %v756, 0.0
    %s761 = scalar_lea.vmem [#allocation10], 64
    %v762 = vld [vmem:[%s761] sm:$0xff]
    %v763 = vld [vmem:[%s761 + $0x8] sm:$0xff]
    %v764 = vld [vmem:[%s761 + $0x10] sm:$0xff]
    %v765 = vld [vmem:[%s761 + $0x18] sm:$0xff]
    %v767 = vsel %vm72, %v757, 0
    %v770 = vsel %vm72, %v758, 0
    %v773 = vsel %vm72, %v759, 0
    %v776 = vsel %vm72, %v760, 0
    %778 = vmatprep.subr.mxu0 0.0
    %779 = vmatpush1.msra.mxu0 %v762
    %780 = vmatprep.subr.mxu0 0.0
    %781 = vmatpush1.msra.mxu0 %v763
    %782 = vmatprep.subr.mxu0 0.0
    %783 = vmatpush1.msra.mxu0 %v764
    %784 = vmatprep.subr.mxu0 0.0
    %785 = vmatpush1.msra.mxu0 %v765
    %786 = vmatprep.subr.mxu0 0.0
    %787 = vmatpush1.msra.mxu0 0.0
    %788 = vmatprep.subr.mxu0 0.0
    %789 = vmatpush1.msra.mxu0 0.0
    %790 = vmatprep.subr.mxu0 0.0
    %791 = vmatpush1.msra.mxu0 0.0
    %792 = vmatprep.subr.mxu0 0.0
    %793 = vmatpush1.msra.mxu0 0.0
    %794 = vmatprep.subr.mxu0 0.0
    %795 = vmatpush1.msra.mxu0 0.0
    %796 = vmatprep.subr.mxu0 0.0
    %797 = vmatpush1.msra.mxu0 0.0
    %798 = vmatprep.subr.mxu0 0.0
    %799 = vmatpush1.msra.mxu0 0.0
    %800 = vmatprep.subr.mxu0 0.0
    %801 = vmatpush1.msra.mxu0 0.0
    %802 = vmatprep.subr.mxu0 0.0
    %803 = vmatpush1.msra.mxu0 0.0
    %804 = vmatprep.subr.mxu0 0.0
    %805 = vmatpush1.msra.mxu0 0.0
    %806 = vmatprep.subr.mxu0 0.0
    %807 = vmatpush1.msra.mxu0 0.0
    %808 = vmatprep.subr.mxu0 0.0
    %809 = vmatpush1.msra.mxu0 0.0
    %810 = vmatprep.subr.mxu0 0.0
    %811 = vmatpush1.msra.mxu0 0.0
    %812 = vmatprep.subr.mxu0 0.0
    %813 = vmatpush1.msra.mxu0 0.0
    %814 = vmatprep.subr.mxu0 0.0
    %815 = vmatpush1.msra.mxu0 0.0
    %816 = vmatprep.subr.mxu0 0.0
    %817 = vmatpush1.msra.mxu0 0.0
    %818 = vmatprep.subr.mxu0 0.0
    %819 = vmatpush1.msra.mxu0 0.0
    %820 = vmatprep.subr.mxu0 0.0
    %821 = vmatpush1.msra.mxu0 0.0
    %822 = vmatprep.subr.mxu0 0.0
    %823 = vmatpush1.msra.mxu0 0.0
    %824 = vmatprep.subr.mxu0 0.0
    %825 = vmatpush1.msra.mxu0 0.0
    %826 = vmatprep.subr.mxu0 0.0
    %827 = vmatpush1.msra.mxu0 0.0
    %828 = vmatprep.subr.mxu0 0.0
    %829 = vmatpush1.msra.mxu0 0.0
    %830 = vmatprep.subr.mxu0 0.0
    %831 = vmatpush1.msra.mxu0 0.0
    %832 = vmatprep.subr.mxu0 0.0
    %833 = vmatpush1.msra.mxu0 0.0
    %834 = vmatprep.subr.mxu0 0.0
    %835 = vmatpush1.msra.mxu0 0.0
    %836 = vmatprep.subr.mxu0 0.0
    %837 = vmatpush1.msra.mxu0 0.0
    %838 = vmatprep.subr.mxu0 0.0
    %839 = vmatpush1.msra.mxu0 0.0
    %840 = vmatprep.subr.mxu0 0.0
    %841 = vmatpush1.msra.mxu0 0.0
    %842 = vmatprep.mubr.f32.mxu0 0.0
    %843 = vmatmul.mubr.f32.gmra.mrb[0].mxu0 %v767
    %v844 = vpop.f32.mrb[0].mxu0
    %v845 = vadd.f32 0.0, %v844
    %v846 = vpop.f32.mrb[0].mxu0
    %847 = vmatprep.mubr.f32.mxu0 0.0
    %848 = vmatmul.mubr.f32.gmra.mrb[0].mxu0 %v770
    %v849 = vpop.f32.mrb[0].mxu0
    %v850 = vadd.f32 0.0, %v849
    %v851 = vpop.f32.mrb[0].mxu0
    %852 = vmatprep.mubr.f32.mxu0 0.0
    %853 = vmatmul.mubr.f32.gmra.mrb[0].mxu0 %v773
    %v854 = vpop.f32.mrb[0].mxu0
    %v855 = vadd.f32 0.0, %v854
    %v856 = vpop.f32.mrb[0].mxu0
    %857 = vmatprep.mubr.f32.mxu0 0.0
    %858 = vmatmul.mubr.f32.gmra.mrb[0].mxu0 %v776
    %v859 = vpop.f32.mrb[0].mxu0
    %v860 = vadd.f32 0.0, %v859
    %v861 = vpop.f32.mrb[0].mxu0
    %862 = vdwg.mxu0
    %863 = vst.msk [vmem:[#allocation2 + $0x8] sm:$0xff] %vm72, %v845
    %864 = vst.msk [vmem:[#allocation2 + $0x10] sm:$0xff] %vm72, %v850
    %865 = vst.msk [vmem:[#allocation2 + $0x18] sm:$0xff] %vm72, %v855
    %866 = vst.msk [vmem:[#allocation2 + $0x20] sm:$0xff] %vm72, %v860
    %871 = vrot.lane.b32.xlu0 %v845, 64
    %v872 = vpop.permute.xlu0 %871
    %873 = vrot.lane.b32.xlu0 %v850, 64
    %v874 = vpop.permute.xlu0 %873
    %875 = vrot.lane.b32.xlu0 %v855, 64
    %v876 = vpop.permute.xlu0 %875
    %877 = vrot.lane.b32.xlu0 %v860, 64
    %v878 = vpop.permute.xlu0 %877
    %883 = vst.msk [vmem:[#allocation3] sm:$0xff] %vm72, %v872
    %884 = vst.msk [vmem:[#allocation3 + $0x8] sm:$0xff] %vm72, %v874
    %885 = vst.msk [vmem:[#allocation3 + $0x10] sm:$0xff] %vm72, %v876
    %886 = vst.msk [vmem:[#allocation3 + $0x18] sm:$0xff] %vm72, %v878
    %v887 = vld [vmem:[#allocation2 + $0x7] sm:$0xff]
    %v888 = vld [vmem:[#allocation2 + $0xf] sm:$0xff]
    %v889 = vld [vmem:[#allocation2 + $0x17] sm:$0xff]
    %v890 = vld [vmem:[#allocation2 + $0x1f] sm:$0xff]
    %v891 = vld [vmem:[#allocation3 + $0x1] sm:$0xff]
    %v892 = vld [vmem:[#allocation3 + $0x9] sm:$0xff]
    %v893 = vld [vmem:[#allocation3 + $0x11] sm:$0xff]
    %v894 = vld [vmem:[#allocation3 + $0x19] sm:$0xff]
    %v895 = vmul.f32 %v887, %v144
    %v896 = vmul.f32 %v888, %v145
    %v897 = vmul.f32 %v889, %v146
    %v898 = vmul.f32 %v890, %v147
    %899 = vrot.lane.b32.xlu0 %v845, 96
    %v900 = vpop.permute.xlu0 %899
    %901 = vrot.lane.b32.xlu0 %v850, 96
    %v902 = vpop.permute.xlu0 %901
    %903 = vrot.lane.b32.xlu0 %v855, 96
    %v904 = vpop.permute.xlu0 %903
    %905 = vrot.lane.b32.xlu0 %v860, 96
    %v906 = vpop.permute.xlu0 %905
    %v911 = vadd.f32 %v895, %v900
    %v912 = vadd.f32 %v896, %v902
    %v913 = vadd.f32 %v897, %v904
    %v914 = vadd.f32 %v898, %v906
    %v915 = vmul.f32 %v891, %v156
    %v916 = vmul.f32 %v892, %v157
    %v917 = vmul.f32 %v893, %v158
    %v918 = vmul.f32 %v894, %v159
    %v919 = vadd.f32 %v911, %v915
    %v920 = vadd.f32 %v912, %v916
    %v921 = vadd.f32 %v913, %v917
    %v922 = vadd.f32 %v914, %v918
    %s923 = scalar_lea.vmem %s4, 2
    %v924 = vld [vmem:[%s923] sm:$0x1]
    %v926 = vlaneseq
    %v927 = vshrl.u32 %v926, 7
    %v928 = vsub.s32 0, %v927
    %v929 = vrot.slane %v924, %v928
    %v931 = vadd.f32 %v919, %v929
    %v932 = vadd.f32 %v920, %v929
    %v933 = vadd.f32 %v921, %v929
    %v934 = vadd.f32 %v922, %v929
    %v935 = vmax.f32 %v931, 0.0
    %v936 = vmax.f32 %v932, 0.0
    %v937 = vmax.f32 %v933, 0.0
    %v938 = vmax.f32 %v934, 0.0
    %s939 = scalar_lea.vmem [#allocation10], 96
    %v940 = vld [vmem:[%s939] sm:$0xff]
    %v941 = vld [vmem:[%s939 + $0x8] sm:$0xff]
    %v942 = vld [vmem:[%s939 + $0x10] sm:$0xff]
    %v943 = vld [vmem:[%s939 + $0x18] sm:$0xff]
    %v945 = vsel %vm72, %v935, 0
    %v948 = vsel %vm72, %v936, 0
    %v951 = vsel %vm72, %v937, 0
    %v954 = vsel %vm72, %v938, 0
    %956 = vmatprep.subr.mxu0 0.0
    %957 = vmatpush1.msra.mxu0 %v940
    %958 = vmatprep.subr.mxu0 0.0
    %959 = vmatpush1.msra.mxu0 %v941
    %960 = vmatprep.subr.mxu0 0.0
    %961 = vmatpush1.msra.mxu0 %v942
    %962 = vmatprep.subr.mxu0 0.0
    %963 = vmatpush1.msra.mxu0 %v943
    %964 = vmatprep.subr.mxu0 0.0
    %965 = vmatpush1.msra.mxu0 0.0
    %966 = vmatprep.subr.mxu0 0.0
    %967 = vmatpush1.msra.mxu0 0.0
    %968 = vmatprep.subr.mxu0 0.0
    %969 = vmatpush1.msra.mxu0 0.0
    %970 = vmatprep.subr.mxu0 0.0
    %971 = vmatpush1.msra.mxu0 0.0
    %972 = vmatprep.subr.mxu0 0.0
    %973 = vmatpush1.msra.mxu0 0.0
    %974 = vmatprep.subr.mxu0 0.0
    %975 = vmatpush1.msra.mxu0 0.0
    %976 = vmatprep.subr.mxu0 0.0
    %977 = vmatpush1.msra.mxu0 0.0
    %978 = vmatprep.subr.mxu0 0.0
    %979 = vmatpush1.msra.mxu0 0.0
    %980 = vmatprep.subr.mxu0 0.0
    %981 = vmatpush1.msra.mxu0 0.0
    %982 = vmatprep.subr.mxu0 0.0
    %983 = vmatpush1.msra.mxu0 0.0
    %984 = vmatprep.subr.mxu0 0.0
    %985 = vmatpush1.msra.mxu0 0.0
    %986 = vmatprep.subr.mxu0 0.0
    %987 = vmatpush1.msra.mxu0 0.0
    %988 = vmatprep.subr.mxu0 0.0
    %989 = vmatpush1.msra.mxu0 0.0
    %990 = vmatprep.subr.mxu0 0.0
    %991 = vmatpush1.msra.mxu0 0.0
    %992 = vmatprep.subr.mxu0 0.0
    %993 = vmatpush1.msra.mxu0 0.0
    %994 = vmatprep.subr.mxu0 0.0
    %995 = vmatpush1.msra.mxu0 0.0
    %996 = vmatprep.subr.mxu0 0.0
    %997 = vmatpush1.msra.mxu0 0.0
    %998 = vmatprep.subr.mxu0 0.0
    %999 = vmatpush1.msra.mxu0 0.0
    %1000 = vmatprep.subr.mxu0 0.0
    %1001 = vmatpush1.msra.mxu0 0.0
    %1002 = vmatprep.subr.mxu0 0.0
    %1003 = vmatpush1.msra.mxu0 0.0
    %1004 = vmatprep.subr.mxu0 0.0
    %1005 = vmatpush1.msra.mxu0 0.0
    %1006 = vmatprep.subr.mxu0 0.0
    %1007 = vmatpush1.msra.mxu0 0.0
    %1008 = vmatprep.subr.mxu0 0.0
    %1009 = vmatpush1.msra.mxu0 0.0
    %1010 = vmatprep.subr.mxu0 0.0
    %1011 = vmatpush1.msra.mxu0 0.0
    %1012 = vmatprep.subr.mxu0 0.0
    %1013 = vmatpush1.msra.mxu0 0.0
    %1014 = vmatprep.subr.mxu0 0.0
    %1015 = vmatpush1.msra.mxu0 0.0
    %1016 = vmatprep.subr.mxu0 0.0
    %1017 = vmatpush1.msra.mxu0 0.0
    %1018 = vmatprep.subr.mxu0 0.0
    %1019 = vmatpush1.msra.mxu0 0.0
    %1020 = vmatprep.mubr.f32.mxu0 0.0
    %1021 = vmatmul.mubr.f32.gmra.mrb[0].mxu0 %v945
    %v1022 = vpop.f32.mrb[0].mxu0
    %v1023 = vadd.f32 0.0, %v1022
    %v1024 = vpop.f32.mrb[0].mxu0
    %1025 = vmatprep.mubr.f32.mxu0 0.0
    %1026 = vmatmul.mubr.f32.gmra.mrb[0].mxu0 %v948
    %v1027 = vpop.f32.mrb[0].mxu0
    %v1028 = vadd.f32 0.0, %v1027
    %v1029 = vpop.f32.mrb[0].mxu0
    %1030 = vmatprep.mubr.f32.mxu0 0.0
    %1031 = vmatmul.mubr.f32.gmra.mrb[0].mxu0 %v951
    %v1032 = vpop.f32.mrb[0].mxu0
    %v1033 = vadd.f32 0.0, %v1032
    %v1034 = vpop.f32.mrb[0].mxu0
    %1035 = vmatprep.mubr.f32.mxu0 0.0
    %1036 = vmatmul.mubr.f32.gmra.mrb[0].mxu0 %v954
    %v1037 = vpop.f32.mrb[0].mxu0
    %v1038 = vadd.f32 0.0, %v1037
    %v1039 = vpop.f32.mrb[0].mxu0
    %1040 = vdwg.mxu0
    %1041 = vst.msk [vmem:[#allocation2 + $0x8] sm:$0xff] %vm72, %v1023
    %1042 = vst.msk [vmem:[#allocation2 + $0x10] sm:$0xff] %vm72, %v1028
    %1043 = vst.msk [vmem:[#allocation2 + $0x18] sm:$0xff] %vm72, %v1033
    %1044 = vst.msk [vmem:[#allocation2 + $0x20] sm:$0xff] %vm72, %v1038
    %1049 = vrot.lane.b32.xlu0 %v1023, 64
    %v1050 = vpop.permute.xlu0 %1049
    %1051 = vrot.lane.b32.xlu0 %v1028, 64
    %v1052 = vpop.permute.xlu0 %1051
    %1053 = vrot.lane.b32.xlu0 %v1033, 64
    %v1054 = vpop.permute.xlu0 %1053
    %1055 = vrot.lane.b32.xlu0 %v1038, 64
    %v1056 = vpop.permute.xlu0 %1055
    %1061 = vst.msk [vmem:[#allocation3] sm:$0xff] %vm72, %v1050
    %1062 = vst.msk [vmem:[#allocation3 + $0x8] sm:$0xff] %vm72, %v1052
    %1063 = vst.msk [vmem:[#allocation3 + $0x10] sm:$0xff] %vm72, %v1054
    %1064 = vst.msk [vmem:[#allocation3 + $0x18] sm:$0xff] %vm72, %v1056
    %v1065 = vld [vmem:[#allocation2 + $0x7] sm:$0xff]
    %v1066 = vld [vmem:[#allocation2 + $0xf] sm:$0xff]
    %v1067 = vld [vmem:[#allocation2 + $0x17] sm:$0xff]
    %v1068 = vld [vmem:[#allocation2 + $0x1f] sm:$0xff]
    %v1069 = vld [vmem:[#allocation3 + $0x1] sm:$0xff]
    %v1070 = vld [vmem:[#allocation3 + $0x9] sm:$0xff]
    %v1071 = vld [vmem:[#allocation3 + $0x11] sm:$0xff]
    %v1072 = vld [vmem:[#allocation3 + $0x19] sm:$0xff]
    %v1073 = vmul.f32 %v1065, %v144
    %v1074 = vmul.f32 %v1066, %v145
    %v1075 = vmul.f32 %v1067, %v146
    %v1076 = vmul.f32 %v1068, %v147
    %1077 = vrot.lane.b32.xlu0 %v1023, 96
    %v1078 = vpop.permute.xlu0 %1077
    %1079 = vrot.lane.b32.xlu0 %v1028, 96
    %v1080 = vpop.permute.xlu0 %1079
    %1081 = vrot.lane.b32.xlu0 %v1033, 96
    %v1082 = vpop.permute.xlu0 %1081
    %1083 = vrot.lane.b32.xlu0 %v1038, 96
    %v1084 = vpop.permute.xlu0 %1083
    %v1089 = vadd.f32 %v1073, %v1078
    %v1090 = vadd.f32 %v1074, %v1080
    %v1091 = vadd.f32 %v1075, %v1082
    %v1092 = vadd.f32 %v1076, %v1084
    %v1093 = vmul.f32 %v1069, %v156
    %v1094 = vmul.f32 %v1070, %v157
    %v1095 = vmul.f32 %v1071, %v158
    %v1096 = vmul.f32 %v1072, %v159
    %v1097 = vadd.f32 %v1089, %v1093
    %v1098 = vadd.f32 %v1090, %v1094
    %v1099 = vadd.f32 %v1091, %v1095
    %v1100 = vadd.f32 %v1092, %v1096
    %s1101 = scalar_lea.vmem %s4, 3
    %v1102 = vld [vmem:[%s1101] sm:$0x1]
    %v1104 = vlaneseq
    %v1105 = vshrl.u32 %v1104, 7
    %v1106 = vsub.s32 0, %v1105
    %v1107 = vrot.slane %v1102, %v1106
    %v1109 = vadd.f32 %v1097, %v1107
    %v1110 = vadd.f32 %v1098, %v1107
    %v1111 = vadd.f32 %v1099, %v1107
    %v1112 = vadd.f32 %v1100, %v1107
    %v1113 = vmax.f32 %v1109, 0.0
    %v1114 = vmax.f32 %v1110, 0.0
    %v1115 = vmax.f32 %v1111, 0.0
    %v1116 = vmax.f32 %v1112, 0.0
    %s1117 = scalar_lea.vmem [#allocation10], 128
    %v1118 = vld [vmem:[%s1117] sm:$0xff]
    %v1119 = vld [vmem:[%s1117 + $0x8] sm:$0xff]
    %v1120 = vld [vmem:[%s1117 + $0x10] sm:$0xff]
    %v1121 = vld [vmem:[%s1117 + $0x18] sm:$0xff]
    %v1123 = vsel %vm72, %v1113, 0
    %v1126 = vsel %vm72, %v1114, 0
    %v1129 = vsel %vm72, %v1115, 0
    %v1132 = vsel %vm72, %v1116, 0
    %1134 = vmatprep.subr.mxu0 0.0
    %1135 = vmatpush1.msra.mxu0 %v1118
    %1136 = vmatprep.subr.mxu0 0.0
    %1137 = vmatpush1.msra.mxu0 %v1119
    %1138 = vmatprep.subr.mxu0 0.0
    %1139 = vmatpush1.msra.mxu0 %v1120
    %1140 = vmatprep.subr.mxu0 0.0
    %1141 = vmatpush1.msra.mxu0 %v1121
    %1142 = vmatprep.subr.mxu0 0.0
    %1143 = vmatpush1.msra.mxu0 0.0
    %1144 = vmatprep.subr.mxu0 0.0
    %1145 = vmatpush1.msra.mxu0 0.0
    %1146 = vmatprep.subr.mxu0 0.0
    %1147 = vmatpush1.msra.mxu0 0.0
    %1148 = vmatprep.subr.mxu0 0.0
    %1149 = vmatpush1.msra.mxu0 0.0
    %1150 = vmatprep.subr.mxu0 0.0
    %1151 = vmatpush1.msra.mxu0 0.0
    %1152 = vmatprep.subr.mxu0 0.0
    %1153 = vmatpush1.msra.mxu0 0.0
    %1154 = vmatprep.subr.mxu0 0.0
    %1155 = vmatpush1.msra.mxu0 0.0
    %1156 = vmatprep.subr.mxu0 0.0
    %1157 = vmatpush1.msra.mxu0 0.0
    %1158 = vmatprep.subr.mxu0 0.0
    %1159 = vmatpush1.msra.mxu0 0.0
    %1160 = vmatprep.subr.mxu0 0.0
    %1161 = vmatpush1.msra.mxu0 0.0
    %1162 = vmatprep.subr.mxu0 0.0
    %1163 = vmatpush1.msra.mxu0 0.0
    %1164 = vmatprep.subr.mxu0 0.0
    %1165 = vmatpush1.msra.mxu0 0.0
    %1166 = vmatprep.subr.mxu0 0.0
    %1167 = vmatpush1.msra.mxu0 0.0
    %1168 = vmatprep.subr.mxu0 0.0
    %1169 = vmatpush1.msra.mxu0 0.0
    %1170 = vmatprep.subr.mxu0 0.0
    %1171 = vmatpush1.msra.mxu0 0.0
    %1172 = vmatprep.subr.mxu0 0.0
    %1173 = vmatpush1.msra.mxu0 0.0
    %1174 = vmatprep.subr.mxu0 0.0
    %1175 = vmatpush1.msra.mxu0 0.0
    %1176 = vmatprep.subr.mxu0 0.0
    %1177 = vmatpush1.msra.mxu0 0.0
    %1178 = vmatprep.subr.mxu0 0.0
    %1179 = vmatpush1.msra.mxu0 0.0
    %1180 = vmatprep.subr.mxu0 0.0
    %1181 = vmatpush1.msra.mxu0 0.0
    %1182 = vmatprep.subr.mxu0 0.0
    %1183 = vmatpush1.msra.mxu0 0.0
    %1184 = vmatprep.subr.mxu0 0.0
    %1185 = vmatpush1.msra.mxu0 0.0
    %1186 = vmatprep.subr.mxu0 0.0
    %1187 = vmatpush1.msra.mxu0 0.0
    %1188 = vmatprep.subr.mxu0 0.0
    %1189 = vmatpush1.msra.mxu0 0.0
    %1190 = vmatprep.subr.mxu0 0.0
    %1191 = vmatpush1.msra.mxu0 0.0
    %1192 = vmatprep.subr.mxu0 0.0
    %1193 = vmatpush1.msra.mxu0 0.0
    %1194 = vmatprep.subr.mxu0 0.0
    %1195 = vmatpush1.msra.mxu0 0.0
    %1196 = vmatprep.subr.mxu0 0.0
    %1197 = vmatpush1.msra.mxu0 0.0
    %1198 = vmatprep.mubr.f32.mxu0 0.0
    %1199 = vmatmul.mubr.f32.gmra.mrb[0].mxu0 %v1123
    %v1200 = vpop.f32.mrb[0].mxu0
    %v1201 = vadd.f32 0.0, %v1200
    %v1202 = vpop.f32.mrb[0].mxu0
    %1203 = vmatprep.mubr.f32.mxu0 0.0
    %1204 = vmatmul.mubr.f32.gmra.mrb[0].mxu0 %v1126
    %v1205 = vpop.f32.mrb[0].mxu0
    %v1206 = vadd.f32 0.0, %v1205
    %v1207 = vpop.f32.mrb[0].mxu0
    %1208 = vmatprep.mubr.f32.mxu0 0.0
    %1209 = vmatmul.mubr.f32.gmra.mrb[0].mxu0 %v1129
    %v1210 = vpop.f32.mrb[0].mxu0
    %v1211 = vadd.f32 0.0, %v1210
    %v1212 = vpop.f32.mrb[0].mxu0
    %1213 = vmatprep.mubr.f32.mxu0 0.0
    %1214 = vmatmul.mubr.f32.gmra.mrb[0].mxu0 %v1132
    %v1215 = vpop.f32.mrb[0].mxu0
    %v1216 = vadd.f32 0.0, %v1215
    %v1217 = vpop.f32.mrb[0].mxu0
    %1218 = vdwg.mxu0
    %1219 = vst.msk [vmem:[#allocation2 + $0x8] sm:$0xff] %vm72, %v1201
    %1220 = vst.msk [vmem:[#allocation2 + $0x10] sm:$0xff] %vm72, %v1206
    %1221 = vst.msk [vmem:[#allocation2 + $0x18] sm:$0xff] %vm72, %v1211
    %1222 = vst.msk [vmem:[#allocation2 + $0x20] sm:$0xff] %vm72, %v1216
    %1227 = vrot.lane.b32.xlu0 %v1201, 64
    %v1228 = vpop.permute.xlu0 %1227
    %1229 = vrot.lane.b32.xlu0 %v1206, 64
    %v1230 = vpop.permute.xlu0 %1229
    %1231 = vrot.lane.b32.xlu0 %v1211, 64
    %v1232 = vpop.permute.xlu0 %1231
    %1233 = vrot.lane.b32.xlu0 %v1216, 64
    %v1234 = vpop.permute.xlu0 %1233
    %1239 = vst.msk [vmem:[#allocation3] sm:$0xff] %vm72, %v1228
    %1240 = vst.msk [vmem:[#allocation3 + $0x8] sm:$0xff] %vm72, %v1230
    %1241 = vst.msk [vmem:[#allocation3 + $0x10] sm:$0xff] %vm72, %v1232
    %1242 = vst.msk [vmem:[#allocation3 + $0x18] sm:$0xff] %vm72, %v1234
    %v1243 = vld [vmem:[#allocation2 + $0x7] sm:$0xff]
    %v1244 = vld [vmem:[#allocation2 + $0xf] sm:$0xff]
    %v1245 = vld [vmem:[#allocation2 + $0x17] sm:$0xff]
    %v1246 = vld [vmem:[#allocation2 + $0x1f] sm:$0xff]
    %v1247 = vld [vmem:[#allocation3 + $0x1] sm:$0xff]
    %v1248 = vld [vmem:[#allocation3 + $0x9] sm:$0xff]
    %v1249 = vld [vmem:[#allocation3 + $0x11] sm:$0xff]
    %v1250 = vld [vmem:[#allocation3 + $0x19] sm:$0xff]
    %v1251 = vmul.f32 %v1243, %v144
    %v1252 = vmul.f32 %v1244, %v145
    %v1253 = vmul.f32 %v1245, %v146
    %v1254 = vmul.f32 %v1246, %v147
    %1255 = vrot.lane.b32.xlu0 %v1201, 96
    %v1256 = vpop.permute.xlu0 %1255
    %1257 = vrot.lane.b32.xlu0 %v1206, 96
    %v1258 = vpop.permute.xlu0 %1257
    %1259 = vrot.lane.b32.xlu0 %v1211, 96
    %v1260 = vpop.permute.xlu0 %1259
    %1261 = vrot.lane.b32.xlu0 %v1216, 96
    %v1262 = vpop.permute.xlu0 %1261
    %v1267 = vadd.f32 %v1251, %v1256
    %v1268 = vadd.f32 %v1252, %v1258
    %v1269 = vadd.f32 %v1253, %v1260
    %v1270 = vadd.f32 %v1254, %v1262
    %v1271 = vmul.f32 %v1247, %v156
    %v1272 = vmul.f32 %v1248, %v157
    %v1273 = vmul.f32 %v1249, %v158
    %v1274 = vmul.f32 %v1250, %v159
    %v1275 = vadd.f32 %v1267, %v1271
    %v1276 = vadd.f32 %v1268, %v1272
    %v1277 = vadd.f32 %v1269, %v1273
    %v1278 = vadd.f32 %v1270, %v1274
    %s1279 = scalar_lea.vmem %s4, 4
    %v1280 = vld [vmem:[%s1279] sm:$0x1]
    %v1282 = vlaneseq
    %v1283 = vshrl.u32 %v1282, 7
    %v1284 = vsub.s32 0, %v1283
    %v1285 = vrot.slane %v1280, %v1284
    %v1287 = vadd.f32 %v1275, %v1285
    %v1288 = vadd.f32 %v1276, %v1285
    %v1289 = vadd.f32 %v1277, %v1285
    %v1290 = vadd.f32 %v1278, %v1285
    %v1291 = vmax.f32 %v1287, 0.0
    %v1292 = vmax.f32 %v1288, 0.0
    %v1293 = vmax.f32 %v1289, 0.0
    %v1294 = vmax.f32 %v1290, 0.0
    %s1295 = scalar_lea.vmem [#allocation10], 160
    %v1296 = vld [vmem:[%s1295] sm:$0xff]
    %v1297 = vld [vmem:[%s1295 + $0x8] sm:$0xff]
    %v1298 = vld [vmem:[%s1295 + $0x10] sm:$0xff]
    %v1299 = vld [vmem:[%s1295 + $0x18] sm:$0xff]
    %v1301 = vsel %vm72, %v1291, 0
    %v1304 = vsel %vm72, %v1292, 0
    %v1307 = vsel %vm72, %v1293, 0
    %v1310 = vsel %vm72, %v1294, 0
    %1312 = vmatprep.subr.mxu0 0.0
    %1313 = vmatpush1.msra.mxu0 %v1296
    %1314 = vmatprep.subr.mxu0 0.0
    %1315 = vmatpush1.msra.mxu0 %v1297
    %1316 = vmatprep.subr.mxu0 0.0
    %1317 = vmatpush1.msra.mxu0 %v1298
    %1318 = vmatprep.subr.mxu0 0.0
    %1319 = vmatpush1.msra.mxu0 %v1299
    %1320 = vmatprep.subr.mxu0 0.0
    %1321 = vmatpush1.msra.mxu0 0.0
    %1322 = vmatprep.subr.mxu0 0.0
    %1323 = vmatpush1.msra.mxu0 0.0
    %1324 = vmatprep.subr.mxu0 0.0
    %1325 = vmatpush1.msra.mxu0 0.0
    %1326 = vmatprep.subr.mxu0 0.0
    %1327 = vmatpush1.msra.mxu0 0.0
    %1328 = vmatprep.subr.mxu0 0.0
    %1329 = vmatpush1.msra.mxu0 0.0
    %1330 = vmatprep.subr.mxu0 0.0
    %1331 = vmatpush1.msra.mxu0 0.0
    %1332 = vmatprep.subr.mxu0 0.0
    %1333 = vmatpush1.msra.mxu0 0.0
    %1334 = vmatprep.subr.mxu0 0.0
    %1335 = vmatpush1.msra.mxu0 0.0
    %1336 = vmatprep.subr.mxu0 0.0
    %1337 = vmatpush1.msra.mxu0 0.0
    %1338 = vmatprep.subr.mxu0 0.0
    %1339 = vmatpush1.msra.mxu0 0.0
    %1340 = vmatprep.subr.mxu0 0.0
    %1341 = vmatpush1.msra.mxu0 0.0
    %1342 = vmatprep.subr.mxu0 0.0
    %1343 = vmatpush1.msra.mxu0 0.0
    %1344 = vmatprep.subr.mxu0 0.0
    %1345 = vmatpush1.msra.mxu0 0.0
    %1346 = vmatprep.subr.mxu0 0.0
    %1347 = vmatpush1.msra.mxu0 0.0
    %1348 = vmatprep.subr.mxu0 0.0
    %1349 = vmatpush1.msra.mxu0 0.0
    %1350 = vmatprep.subr.mxu0 0.0
    %1351 = vmatpush1.msra.mxu0 0.0
    %1352 = vmatprep.subr.mxu0 0.0
    %1353 = vmatpush1.msra.mxu0 0.0
    %1354 = vmatprep.subr.mxu0 0.0
    %1355 = vmatpush1.msra.mxu0 0.0
    %1356 = vmatprep.subr.mxu0 0.0
    %1357 = vmatpush1.msra.mxu0 0.0
    %1358 = vmatprep.subr.mxu0 0.0
    %1359 = vmatpush1.msra.mxu0 0.0
    %1360 = vmatprep.subr.mxu0 0.0
    %1361 = vmatpush1.msra.mxu0 0.0
    %1362 = vmatprep.subr.mxu0 0.0
    %1363 = vmatpush1.msra.mxu0 0.0
    %1364 = vmatprep.subr.mxu0 0.0
    %1365 = vmatpush1.msra.mxu0 0.0
    %1366 = vmatprep.subr.mxu0 0.0
    %1367 = vmatpush1.msra.mxu0 0.0
    %1368 = vmatprep.subr.mxu0 0.0
    %1369 = vmatpush1.msra.mxu0 0.0
    %1370 = vmatprep.subr.mxu0 0.0
    %1371 = vmatpush1.msra.mxu0 0.0
    %1372 = vmatprep.subr.mxu0 0.0
    %1373 = vmatpush1.msra.mxu0 0.0
    %1374 = vmatprep.subr.mxu0 0.0
    %1375 = vmatpush1.msra.mxu0 0.0
    %1376 = vmatprep.mubr.f32.mxu0 0.0
    %1377 = vmatmul.mubr.f32.gmra.mrb[0].mxu0 %v1301
    %v1378 = vpop.f32.mrb[0].mxu0
    %v1379 = vadd.f32 0.0, %v1378
    %v1380 = vpop.f32.mrb[0].mxu0
    %1381 = vmatprep.mubr.f32.mxu0 0.0
    %1382 = vmatmul.mubr.f32.gmra.mrb[0].mxu0 %v1304
    %v1383 = vpop.f32.mrb[0].mxu0
    %v1384 = vadd.f32 0.0, %v1383
    %v1385 = vpop.f32.mrb[0].mxu0
    %1386 = vmatprep.mubr.f32.mxu0 0.0
    %1387 = vmatmul.mubr.f32.gmra.mrb[0].mxu0 %v1307
    %v1388 = vpop.f32.mrb[0].mxu0
    %v1389 = vadd.f32 0.0, %v1388
    %v1390 = vpop.f32.mrb[0].mxu0
    %1391 = vmatprep.mubr.f32.mxu0 0.0
    %1392 = vmatmul.mubr.f32.gmra.mrb[0].mxu0 %v1310
    %v1393 = vpop.f32.mrb[0].mxu0
    %v1394 = vadd.f32 0.0, %v1393
    %v1395 = vpop.f32.mrb[0].mxu0
    %1396 = vdwg.mxu0
    %1397 = vst.msk [vmem:[#allocation2 + $0x8] sm:$0xff] %vm72, %v1379
    %1398 = vst.msk [vmem:[#allocation2 + $0x10] sm:$0xff] %vm72, %v1384
    %1399 = vst.msk [vmem:[#allocation2 + $0x18] sm:$0xff] %vm72, %v1389
    %1400 = vst.msk [vmem:[#allocation2 + $0x20] sm:$0xff] %vm72, %v1394
    %1405 = vrot.lane.b32.xlu0 %v1379, 64
    %v1406 = vpop.permute.xlu0 %1405
    %1407 = vrot.lane.b32.xlu0 %v1384, 64
    %v1408 = vpop.permute.xlu0 %1407
    %1409 = vrot.lane.b32.xlu0 %v1389, 64
    %v1410 = vpop.permute.xlu0 %1409
    %1411 = vrot.lane.b32.xlu0 %v1394, 64
    %v1412 = vpop.permute.xlu0 %1411
    %1417 = vst.msk [vmem:[#allocation3] sm:$0xff] %vm72, %v1406
    %1418 = vst.msk [vmem:[#allocation3 + $0x8] sm:$0xff] %vm72, %v1408
    %1419 = vst.msk [vmem:[#allocation3 + $0x10] sm:$0xff] %vm72, %v1410
    %1420 = vst.msk [vmem:[#allocation3 + $0x18] sm:$0xff] %vm72, %v1412
    %v1421 = vld [vmem:[#allocation2 + $0x7] sm:$0xff]
    %v1422 = vld [vmem:[#allocation2 + $0xf] sm:$0xff]
    %v1423 = vld [vmem:[#allocation2 + $0x17] sm:$0xff]
    %v1424 = vld [vmem:[#allocation2 + $0x1f] sm:$0xff]
    %v1425 = vld [vmem:[#allocation3 + $0x1] sm:$0xff]
    %v1426 = vld [vmem:[#allocation3 + $0x9] sm:$0xff]
    %v1427 = vld [vmem:[#allocation3 + $0x11] sm:$0xff]
    %v1428 = vld [vmem:[#allocation3 + $0x19] sm:$0xff]
    %v1429 = vmul.f32 %v1421, %v144
    %v1430 = vmul.f32 %v1422, %v145
    %v1431 = vmul.f32 %v1423, %v146
    %v1432 = vmul.f32 %v1424, %v147
    %1433 = vrot.lane.b32.xlu0 %v1379, 96
    %v1434 = vpop.permute.xlu0 %1433
    %1435 = vrot.lane.b32.xlu0 %v1384, 96
    %v1436 = vpop.permute.xlu0 %1435
    %1437 = vrot.lane.b32.xlu0 %v1389, 96
    %v1438 = vpop.permute.xlu0 %1437
    %1439 = vrot.lane.b32.xlu0 %v1394, 96
    %v1440 = vpop.permute.xlu0 %1439
    %v1445 = vadd.f32 %v1429, %v1434
    %v1446 = vadd.f32 %v1430, %v1436
    %v1447 = vadd.f32 %v1431, %v1438
    %v1448 = vadd.f32 %v1432, %v1440
    %v1449 = vmul.f32 %v1425, %v156
    %v1450 = vmul.f32 %v1426, %v157
    %v1451 = vmul.f32 %v1427, %v158
    %v1452 = vmul.f32 %v1428, %v159
    %v1453 = vadd.f32 %v1445, %v1449
    %v1454 = vadd.f32 %v1446, %v1450
    %v1455 = vadd.f32 %v1447, %v1451
    %v1456 = vadd.f32 %v1448, %v1452
    %s1457 = scalar_lea.vmem %s4, 5
    %v1458 = vld [vmem:[%s1457] sm:$0x1]
    %v1460 = vlaneseq
    %v1461 = vshrl.u32 %v1460, 7
    %v1462 = vsub.s32 0, %v1461
    %v1463 = vrot.slane %v1458, %v1462
    %v1465 = vadd.f32 %v1453, %v1463
    %v1466 = vadd.f32 %v1454, %v1463
    %v1467 = vadd.f32 %v1455, %v1463
    %v1468 = vadd.f32 %v1456, %v1463
    %v1469 = vmax.f32 %v1465, 0.0
    %v1470 = vmax.f32 %v1466, 0.0
    %v1471 = vmax.f32 %v1467, 0.0
    %v1472 = vmax.f32 %v1468, 0.0
    %1473 = vst.msk [vmem:[%s5] sm:$0xff] %vm72, %v1469
    %1474 = vst.msk [vmem:[%s5 + $0x8] sm:$0xff] %vm72, %v1470
    %1475 = vst.msk [vmem:[%s5 + $0x10] sm:$0xff] %vm72, %v1471
    %1476 = vst.msk [vmem:[%s5 + $0x18] sm:$0xff] %vm72, %v1472
    // Predicated region
    $region38: #{cnn_decoder_forward.1} parent=1 // pred_check
      _
    $region39: #{cnn_decoder_forward.1} parent=1 // pred_check_branch
      %1478 = sbr.rel (0) target = $region41
    $region40: #{cnn_decoder_forward.1} parent=1 // pred_region
      _
    $region41: #{cnn_decoder_forward.1} parent=1 // pred_fallthru
      _
    // Predicated region
    $region42: #{cnn_decoder_forward.1} parent=1 // pred_check
      _
    $region43: #{cnn_decoder_forward.1} parent=1 // pred_check_branch
      %1480 = sbr.rel (0) target = $region45
    $region44: #{cnn_decoder_forward.1} parent=1 // pred_region
      _
    $region45: #{cnn_decoder_forward.1} parent=1 // pred_fallthru
      _
    %1481 = vsyncpa [#allocation5], 1
    %1482 = vsyncpa [#allocation9], 1
    %1483 = vsyncpa [#allocation6], 1

</llo_original>
